<compile_context>
chip_gen: v5e
topology: v5e:2x2
jax: 0.10.0
libtpu: 0.0.40
codegen_flags: <defaults>
</compile_context>

<pallas_src>
import jax
import jax.numpy as jnp
from jax import lax
from jax.experimental import pallas as pl
from jax.experimental.pallas import tpu as pltpu

BT = 8  # images processed per grid step


# ----------------------------------------------------------------------------
# Kernel
# ----------------------------------------------------------------------------
def _leaky_relu(x):
    return jnp.where(x > 0, x, 0.2 * x)


def _conv_taps(read_tap, w_ref, b_ref):
    """One k4/stride-2/pad-1 conv layer as 4 MXU matmuls (one per kernel row).

    read_tap(i) returns the bf16 tap-i input rows, shape (M, Win*Cin).
    w_ref[i] is the matching (Win*Cin, Wo*Cout) block-Toeplitz bf16 slab (the
    width-direction conv, incl. its stride-2/pad, is folded into it), so each
    matmul result is a full (M, Wo*Cout) slab -- 128 lanes wide.
    """
    acc = jnp.dot(read_tap(0), w_ref[0], preferred_element_type=jnp.float32)
    for i in range(1, 4):
        acc = acc + jnp.dot(read_tap(i), w_ref[i],
                            preferred_element_type=jnp.float32)
    return _leaky_relu(acc + b_ref[...])          # f32 epilogue


def _disc_fused_kernel(x_ref, w1_ref, b1_ref, w2_ref, b2_ref, w3_ref, b3_ref,
                       w4_ref, b4_ref, out_ref, a2_ref, a3_ref):
    # ---- conv1: 16x16x3 -> 8x8x16 -----------------------------------------
    # x_ref is (4, BT*8, 48) bf16: tap i, rows ordered (image b, out-row oh).
    y1 = _conv_taps(lambda i: x_ref[i], w1_ref, b1_ref)        # (BT*8, 128) f32

    # Scatter into per-image H-zero-padded scratch, (BT*10, 8*16=128).
    a2_ref[...] = jnp.zeros_like(a2_ref)          # border rows must be zero
    for b in range(BT):
        a2_ref[b * 10 + 1:b * 10 + 9, :] = y1[b * 8:(b + 1) * 8, :]

    # ---- conv2: 8x8x16 -> 4x4x32 -------------------------------------------
    def read2(i):
        parts = [a2_ref[pl.ds(b * 10 + i, 4, 2), :] for b in range(BT)]
        return jnp.concatenate(parts, axis=0).astype(jnp.bfloat16)  # (BT*4,128)

    y2 = _conv_taps(read2, w2_ref, b2_ref)                     # (BT*4, 128) f32

    a3_ref[...] = jnp.zeros_like(a3_ref)          # (BT*6, 4*32=128)
    for b in range(BT):
        a3_ref[b * 6 + 1:b * 6 + 5, :] = y2[b * 4:(b + 1) * 4, :]

    # ---- conv3: 4x4x32 -> 2x2x64 -------------------------------------------
    def read3(i):
        parts = [a3_ref[pl.ds(b * 6 + i, 2, 2), :] for b in range(BT)]
        return jnp.concatenate(parts, axis=0).astype(jnp.bfloat16)  # (BT*2,128)

    y3 = _conv_taps(read3, w3_ref, b3_ref)                     # (BT*2, 128) f32

    # ---- dense (256 -> 1) + sigmoid as a fused VPU/XLU reduction epilogue --
    w4 = w4_ref[...]                                           # (2, 128) f32
    logits = []
    for b in range(BT):
        t = jnp.sum(y3[b * 2:(b + 1) * 2, :] * w4, axis=1, keepdims=True)  # (2,1)
        logits.append(jnp.sum(t, axis=0, keepdims=True) + b4_ref[...])     # (1,1)
    logit = jnp.concatenate(logits, axis=0)                    # (BT, 1)
    out_ref[...] = 1.0 / (1.0 + jnp.exp(-logit))               # exact sigmoid, f32


# ----------------------------------------------------------------------------
# Host-side parameter packing (done once, outside the hot path)
# ----------------------------------------------------------------------------
def init_params(key, in_channels=3):
    """Natural (PyTorch-like) parameter shapes; identical to previous version."""
    keys = jax.random.split(key, 8)
    scale = 0.05
    return {
        "w1": scale * jax.random.normal(keys[0], (4, 4, in_channels, 16), jnp.float32),
        "b1": jnp.zeros((16,), jnp.float32),
        "w2": scale * jax.random.normal(keys[1], (4, 4, 16, 32), jnp.float32),
        "b2": jnp.zeros((32,), jnp.float32),
        "w3": scale * jax.random.normal(keys[2], (4, 4, 32, 64), jnp.float32),
        "b3": jnp.zeros((64,), jnp.float32),
        "w4": scale * jax.random.normal(keys[3], (64 * 2 * 2, 1), jnp.float32),
        "b4": jnp.zeros((1,), jnp.float32),
    }


def _pack_conv(w, b, wo):
    """Fold the width-direction conv (stride 2, pad 1) into the weights.

    w: (4, 4, Cin, Cout) HWIO, b: (Cout,), wo = output width (= output height).
    Returns:
      wt: (4, Win*Cin, Wo*Cout) bf16 block-Toeplitz slabs (one per kernel row)
      bt: (1, Wo*Cout) f32 bias tiled across output columns
    Kernel math per kernel-row tap i:
      Y[oh, ow*Cout+co] += sum_{q,c} XHpad[2*oh+i, q*Cin+c] * wt[i, q*Cin+c, ow*Cout+co]
    where XHpad is height-padded only; out-of-range width taps simply have
    zero weight (so no width padding is ever materialized).
    """
    kh, kw, cin, cout = w.shape
    win = 2 * wo
    wt = jnp.zeros((kh, win * cin, wo * cout), jnp.float32)
    for i in range(kh):
        for ow in range(wo):
            for j in range(kw):
                q = 2 * ow + j - 1            # unpadded input column (pad = 1)
                if 0 <= q < win:
                    wt = wt.at[i, q * cin:(q + 1) * cin,
                               ow * cout:(ow + 1) * cout].set(w[i, j])
    bt = jnp.tile(b, (wo,)).reshape(1, wo * cout).astype(jnp.float32)
    return wt.astype(jnp.bfloat16), bt


def pack_params(params):
    w1, b1 = _pack_conv(params["w1"], params["b1"], wo=8)   # (4,  48, 128)
    w2, b2 = _pack_conv(params["w2"], params["b2"], wo=4)   # (4, 128, 128)
    w3, b3 = _pack_conv(params["w3"], params["b3"], wo=2)   # (4, 128, 128)
    # Dense weight laid out to match the kernel's (2, 128) = (oh, ow*64+c)
    # activation slab; this equals the NHWC flatten order of (2, 2, 64).
    w4 = params["w4"][:, 0].reshape(2, 128).astype(jnp.float32)
    b4 = params["b4"].reshape(1, 1).astype(jnp.float32)
    return {"w1": w1, "b1": b1, "w2": w2, "b2": b2, "w3": w3, "b3": b3,
            "w4": w4, "b4": b4}


# ----------------------------------------------------------------------------
# Forward pass: single fused pallas_call, gridded over batch tiles of BT
# ----------------------------------------------------------------------------
@jax.jit
def image_discriminator_forward(packed, batch_data):
    """batch_data: NCHW float32 [B, 3, 16, 16] -> [B, 1] probability."""
    B = batch_data.shape[0]
    Bp = ((B + BT - 1) // BT) * BT                              # pad batch to mult of BT

    x = jnp.transpose(batch_data, (0, 2, 3, 1)).astype(jnp.float32)   # NHWC (B,16,16,3)
    if Bp != B:
        x = jnp.pad(x, ((0, Bp - B), (0, 0), (0, 0), (0, 0)))
    xp = jnp.pad(x, ((0, 0), (1, 1), (0, 0), (0, 0)))           # H-pad: (Bp,18,16,3)
    xp = xp.reshape(Bp, 18, 48)                                 # rows = (W,C) lanes
    # Pre-expand conv1's stride-2 kernel-row taps: xtap[i, b*8+oh] = xp[b, 2*oh+i]
    xtap = jnp.stack([xp[:, i:i + 16:2, :] for i in range(4)], axis=0)  # (4,Bp,8,48)
    xtap = xtap.reshape(4, Bp * 8, 48).astype(jnp.bfloat16)

    grid_spec = pltpu.PrefetchScalarGridSpec(
        num_scalar_prefetch=0,
        grid=(Bp // BT,),
        in_specs=[
            pl.BlockSpec((4, BT * 8, 48), lambda b: (0, b, 0)),  # conv1 tap slabs
            pl.BlockSpec((4, 48, 128), lambda b: (0, 0, 0)),     # conv1 weights (resident)
            pl.BlockSpec((1, 128), lambda b: (0, 0)),            # conv1 bias
            pl.BlockSpec((4, 128, 128), lambda b: (0, 0, 0)),    # conv2 weights
            pl.BlockSpec((1, 128), lambda b: (0, 0)),            # conv2 bias
            pl.BlockSpec((4, 128, 128), lambda b: (0, 0, 0)),    # conv3 weights
            pl.BlockSpec((1, 128), lambda b: (0, 0)),            # conv3 bias
            pl.BlockSpec((2, 128), lambda b: (0, 0)),            # dense weight
            pl.BlockSpec((1, 1), lambda b: (0, 0)),              # dense bias
        ],
        out_specs=pl.BlockSpec((BT, 1), lambda b: (b, 0)),
        scratch_shapes=[
            pltpu.VMEM((BT * 10, 128), jnp.float32),  # H-padded conv1 out (conv2 in)
            pltpu.VMEM((BT * 6, 128), jnp.float32),   # H-padded conv2 out (conv3 in)
        ],
    )

    out = pl.pallas_call(
        _disc_fused_kernel,
        out_shape=jax.ShapeDtypeStruct((Bp, 1), jnp.float32),
        grid_spec=grid_spec,
        compiler_params=pltpu.CompilerParams(
            dimension_semantics=("parallel",),    # v7x: batch tiles split across both TCs
        ),
    )(xtap, packed["w1"], packed["b1"], packed["w2"], packed["b2"],
      packed["w3"], packed["b3"], packed["w4"], packed["b4"])

    return out[:B]


# ----------------------------------------------------------------------------
# Pure-JAX reference (same math, f32 weights) for correctness checking
# ----------------------------------------------------------------------------
def _reference_forward(params, batch_data):
    x = jnp.transpose(batch_data, (0, 2, 3, 1)).astype(jnp.float32)   # NHWC

    def conv(h, w, b):
        y = lax.conv_general_dilated(h, w, (2, 2), [(1, 1), (1, 1)],
                                     dimension_numbers=("NHWC", "HWIO", "NHWC"))
        y = y + b
        return jnp.where(y > 0, y, 0.2 * y)

    h = conv(x, params["w1"], params["b1"])
    h = conv(h, params["w2"], params["b2"])
    h = conv(h, params["w3"], params["b3"])
    h = h.reshape(h.shape[0], -1)                                     # NHWC flatten
    logit = h @ params["w4"] + params["b4"]
    return jax.nn.sigmoid(logit)


if __name__ == "__main__":
    key = jax.random.PRNGKey(0)
    pkey, xkey = jax.random.split(key)
    params = init_params(pkey, in_channels=3)
    packed = pack_params(params)

    # Small image batch consistent with an image discriminator: [B, C, H, W]
    batch_data = jax.random.normal(xkey, (2, 3, 16, 16), jnp.float32)

    out = image_discriminator_forward(packed, batch_data)
    out = jax.block_until_ready(out)

    ref = _reference_forward(params, batch_data)

    assert out.shape == (2, 1)
    assert bool(jnp.all(jnp.isfinite(out)))
    assert bool(jnp.all((out >= 0.0) & (out <= 1.0)))
    max_err = float(jnp.max(jnp.abs(out - ref)))
    assert max_err < 5e-3, f"mismatch vs pure-JAX reference: {max_err}"
    print("KERNEL_OK")
</pallas_src>

<mosaic_0001>
module attributes {stable_mosaic.version = 11 : i64} {
  func.func @_disc_fused_kernel(%arg0: i32, %arg1: memref<4x64x48xbf16, #tpu.memory_space<vmem>>, %arg2: memref<4x48x128xbf16, #tpu.memory_space<vmem>>, %arg3: memref<1x128xf32, #tpu.memory_space<vmem>>, %arg4: memref<4x128x128xbf16, #tpu.memory_space<vmem>>, %arg5: memref<1x128xf32, #tpu.memory_space<vmem>>, %arg6: memref<4x128x128xbf16, #tpu.memory_space<vmem>>, %arg7: memref<1x128xf32, #tpu.memory_space<vmem>>, %arg8: memref<2x128xf32, #tpu.memory_space<vmem>>, %arg9: memref<1x1xf32, #tpu.memory_space<vmem>>, %arg10: memref<8x1xf32, #tpu.memory_space<vmem>>, %arg11: memref<80x128xf32, #tpu.memory_space<vmem>>, %arg12: memref<48x128xf32, #tpu.memory_space<vmem>>) attributes {dimension_semantics = [#tpu.dimension_semantics<parallel>], iteration_bounds = array<i64: 1>, scalar_prefetch = 0 : i64, scratch_operands = 2 : i64, tpu.core_type = #tpu.core_type<tc>, window_params = [{transform_indices = @transform_0, window_bounds = array<i64: 4, 64, 48>}, {pipeline_mode = #tpu.pipeline_mode<synchronous>, transform_indices = @transform_1, window_bounds = array<i64: 4, 48, 128>}, {pipeline_mode = #tpu.pipeline_mode<synchronous>, transform_indices = @transform_2, window_bounds = array<i64: 1, 128>}, {pipeline_mode = #tpu.pipeline_mode<synchronous>, transform_indices = @transform_3, window_bounds = array<i64: 4, 128, 128>}, {pipeline_mode = #tpu.pipeline_mode<synchronous>, transform_indices = @transform_4, window_bounds = array<i64: 1, 128>}, {pipeline_mode = #tpu.pipeline_mode<synchronous>, transform_indices = @transform_5, window_bounds = array<i64: 4, 128, 128>}, {pipeline_mode = #tpu.pipeline_mode<synchronous>, transform_indices = @transform_6, window_bounds = array<i64: 1, 128>}, {pipeline_mode = #tpu.pipeline_mode<synchronous>, transform_indices = @transform_7, window_bounds = array<i64: 2, 128>}, {pipeline_mode = #tpu.pipeline_mode<synchronous>, transform_indices = @transform_8, window_bounds = array<i64: 1, 1>}, {transform_indices = @transform_9, window_bounds = array<i64: 8, 1>}]} {
    %c0 = arith.constant 0 : index
    %c0_0 = arith.constant 0 : index
    %c0_1 = arith.constant 0 : index
    %0 = vector.load %arg1[%c0, %c0_0, %c0_1] : memref<4x64x48xbf16, #tpu.memory_space<vmem>>, vector<1x64x48xbf16>
    %1 = vector.shape_cast %0 : vector<1x64x48xbf16> to vector<64x48xbf16>
    %c0_2 = arith.constant 0 : index
    %c0_3 = arith.constant 0 : index
    %c0_4 = arith.constant 0 : index
    %2 = vector.load %arg2[%c0_2, %c0_3, %c0_4] : memref<4x48x128xbf16, #tpu.memory_space<vmem>>, vector<1x48x128xbf16>
    %3 = vector.shape_cast %2 : vector<1x48x128xbf16> to vector<48x128xbf16>
    %cst = arith.constant dense<0.000000e+00> : vector<64x128xf32>
    %4 = tpu.matmul %1, %3, %cst {dimension_numbers = #tpu.dot_dimension_numbers<[1], [0], [0], [1], [0, 0, 1, 1], [], []>} : vector<64x48xbf16>, vector<48x128xbf16>, vector<64x128xf32> -> vector<64x128xf32>
    %c1 = arith.constant 1 : index
    %c0_5 = arith.constant 0 : index
    %c0_6 = arith.constant 0 : index
    %5 = vector.load %arg1[%c1, %c0_5, %c0_6] : memref<4x64x48xbf16, #tpu.memory_space<vmem>>, vector<1x64x48xbf16>
    %6 = vector.shape_cast %5 : vector<1x64x48xbf16> to vector<64x48xbf16>
    %c1_7 = arith.constant 1 : index
    %c0_8 = arith.constant 0 : index
    %c0_9 = arith.constant 0 : index
    %7 = vector.load %arg2[%c1_7, %c0_8, %c0_9] : memref<4x48x128xbf16, #tpu.memory_space<vmem>>, vector<1x48x128xbf16>
    %8 = vector.shape_cast %7 : vector<1x48x128xbf16> to vector<48x128xbf16>
    %cst_10 = arith.constant dense<0.000000e+00> : vector<64x128xf32>
    %9 = tpu.matmul %6, %8, %cst_10 {dimension_numbers = #tpu.dot_dimension_numbers<[1], [0], [0], [1], [0, 0, 1, 1], [], []>} : vector<64x48xbf16>, vector<48x128xbf16>, vector<64x128xf32> -> vector<64x128xf32>
    %10 = arith.addf %4, %9 : vector<64x128xf32>
    %c2 = arith.constant 2 : index
    %c0_11 = arith.constant 0 : index
    %c0_12 = arith.constant 0 : index
    %11 = vector.load %arg1[%c2, %c0_11, %c0_12] : memref<4x64x48xbf16, #tpu.memory_space<vmem>>, vector<1x64x48xbf16>
    %12 = vector.shape_cast %11 : vector<1x64x48xbf16> to vector<64x48xbf16>
    %c2_13 = arith.constant 2 : index
    %c0_14 = arith.constant 0 : index
    %c0_15 = arith.constant 0 : index
    %13 = vector.load %arg2[%c2_13, %c0_14, %c0_15] : memref<4x48x128xbf16, #tpu.memory_space<vmem>>, vector<1x48x128xbf16>
    %14 = vector.shape_cast %13 : vector<1x48x128xbf16> to vector<48x128xbf16>
    %cst_16 = arith.constant dense<0.000000e+00> : vector<64x128xf32>
    %15 = tpu.matmul %12, %14, %cst_16 {dimension_numbers = #tpu.dot_dimension_numbers<[1], [0], [0], [1], [0, 0, 1, 1], [], []>} : vector<64x48xbf16>, vector<48x128xbf16>, vector<64x128xf32> -> vector<64x128xf32>
    %16 = arith.addf %10, %15 : vector<64x128xf32>
    %c3 = arith.constant 3 : index
    %c0_17 = arith.constant 0 : index
    %c0_18 = arith.constant 0 : index
    %17 = vector.load %arg1[%c3, %c0_17, %c0_18] : memref<4x64x48xbf16, #tpu.memory_space<vmem>>, vector<1x64x48xbf16>
    %18 = vector.shape_cast %17 : vector<1x64x48xbf16> to vector<64x48xbf16>
    %c3_19 = arith.constant 3 : index
    %c0_20 = arith.constant 0 : index
    %c0_21 = arith.constant 0 : index
    %19 = vector.load %arg2[%c3_19, %c0_20, %c0_21] : memref<4x48x128xbf16, #tpu.memory_space<vmem>>, vector<1x48x128xbf16>
    %20 = vector.shape_cast %19 : vector<1x48x128xbf16> to vector<48x128xbf16>
    %cst_22 = arith.constant dense<0.000000e+00> : vector<64x128xf32>
    %21 = tpu.matmul %18, %20, %cst_22 {dimension_numbers = #tpu.dot_dimension_numbers<[1], [0], [0], [1], [0, 0, 1, 1], [], []>} : vector<64x48xbf16>, vector<48x128xbf16>, vector<64x128xf32> -> vector<64x128xf32>
    %22 = arith.addf %16, %21 : vector<64x128xf32>
    %c0_23 = arith.constant 0 : index
    %c0_24 = arith.constant 0 : index
    %23 = vector.load %arg3[%c0_23, %c0_24] : memref<1x128xf32, #tpu.memory_space<vmem>>, vector<1x128xf32>
    %24 = vector.broadcast %23 : vector<1x128xf32> to vector<64x128xf32>
    %25 = arith.addf %22, %24 : vector<64x128xf32>
    %cst_25 = arith.constant 0.000000e+00 : f32
    %26 = vector.broadcast %cst_25 : f32 to vector<64x128xf32>
    %27 = arith.cmpf ogt, %25, %26 : vector<64x128xf32>
    %cst_26 = arith.constant 2.000000e-01 : f32
    %28 = vector.broadcast %cst_26 : f32 to vector<64x128xf32>
    %29 = arith.mulf %28, %25 : vector<64x128xf32>
    %30 = arith.select %27, %25, %29 : vector<64x128xi1>, vector<64x128xf32>
    %cst_27 = arith.constant 0.000000e+00 : f32
    %31 = vector.broadcast %cst_27 : f32 to vector<80x128xf32>
    %c0_28 = arith.constant 0 : index
    %c0_29 = arith.constant 0 : index
    %32 = vector.load %arg11[%c0_28, %c0_29] : memref<80x128xf32, #tpu.memory_space<vmem>>, vector<80x128xf32>
    tpu.vector_store %arg11[%c0_28, %c0_29], %31 {strides = array<i32>} : memref<80x128xf32, #tpu.memory_space<vmem>>, vector<80x128xf32>,
    %33 = vector.extract_strided_slice %30 {offsets = [0, 0], sizes = [8, 128], strides = [1, 1]} : vector<64x128xf32> to vector<8x128xf32>
    %c1_30 = arith.constant 1 : index
    %c0_31 = arith.constant 0 : index
    %34 = vector.load %arg11[%c1_30, %c0_31] : memref<80x128xf32, #tpu.memory_space<vmem>>, vector<8x128xf32>
    tpu.vector_store %arg11[%c1_30, %c0_31], %33 {strides = array<i32>} : memref<80x128xf32, #tpu.memory_space<vmem>>, vector<8x128xf32>,
    %35 = vector.extract_strided_slice %30 {offsets = [8, 0], sizes = [8, 128], strides = [1, 1]} : vector<64x128xf32> to vector<8x128xf32>
    %c11 = arith.constant 11 : index
    %c0_32 = arith.constant 0 : index
    %36 = vector.load %arg11[%c11, %c0_32] : memref<80x128xf32, #tpu.memory_space<vmem>>, vector<8x128xf32>
    tpu.vector_store %arg11[%c11, %c0_32], %35 {strides = array<i32>} : memref<80x128xf32, #tpu.memory_space<vmem>>, vector<8x128xf32>,
    %37 = vector.extract_strided_slice %30 {offsets = [16, 0], sizes = [8, 128], strides = [1, 1]} : vector<64x128xf32> to vector<8x128xf32>
    %c21 = arith.constant 21 : index
    %c0_33 = arith.constant 0 : index
    %38 = vector.load %arg11[%c21, %c0_33] : memref<80x128xf32, #tpu.memory_space<vmem>>, vector<8x128xf32>
    tpu.vector_store %arg11[%c21, %c0_33], %37 {strides = array<i32>} : memref<80x128xf32, #tpu.memory_space<vmem>>, vector<8x128xf32>,
    %39 = vector.extract_strided_slice %30 {offsets = [24, 0], sizes = [8, 128], strides = [1, 1]} : vector<64x128xf32> to vector<8x128xf32>
    %c31 = arith.constant 31 : index
    %c0_34 = arith.constant 0 : index
    %40 = vector.load %arg11[%c31, %c0_34] : memref<80x128xf32, #tpu.memory_space<vmem>>, vector<8x128xf32>
    tpu.vector_store %arg11[%c31, %c0_34], %39 {strides = array<i32>} : memref<80x128xf32, #tpu.memory_space<vmem>>, vector<8x128xf32>,
    %41 = vector.extract_strided_slice %30 {offsets = [32, 0], sizes = [8, 128], strides = [1, 1]} : vector<64x128xf32> to vector<8x128xf32>
    %c41 = arith.constant 41 : index
    %c0_35 = arith.constant 0 : index
    %42 = vector.load %arg11[%c41, %c0_35] : memref<80x128xf32, #tpu.memory_space<vmem>>, vector<8x128xf32>
    tpu.vector_store %arg11[%c41, %c0_35], %41 {strides = array<i32>} : memref<80x128xf32, #tpu.memory_space<vmem>>, vector<8x128xf32>,
    %43 = vector.extract_strided_slice %30 {offsets = [40, 0], sizes = [8, 128], strides = [1, 1]} : vector<64x128xf32> to vector<8x128xf32>
    %c51 = arith.constant 51 : index
    %c0_36 = arith.constant 0 : index
    %44 = vector.load %arg11[%c51, %c0_36] : memref<80x128xf32, #tpu.memory_space<vmem>>, vector<8x128xf32>
    tpu.vector_store %arg11[%c51, %c0_36], %43 {strides = array<i32>} : memref<80x128xf32, #tpu.memory_space<vmem>>, vector<8x128xf32>,
    %45 = vector.extract_strided_slice %30 {offsets = [48, 0], sizes = [8, 128], strides = [1, 1]} : vector<64x128xf32> to vector<8x128xf32>
    %c61 = arith.constant 61 : index
    %c0_37 = arith.constant 0 : index
    %46 = vector.load %arg11[%c61, %c0_37] : memref<80x128xf32, #tpu.memory_space<vmem>>, vector<8x128xf32>
    tpu.vector_store %arg11[%c61, %c0_37], %45 {strides = array<i32>} : memref<80x128xf32, #tpu.memory_space<vmem>>, vector<8x128xf32>,
    %47 = vector.extract_strided_slice %30 {offsets = [56, 0], sizes = [8, 128], strides = [1, 1]} : vector<64x128xf32> to vector<8x128xf32>
    %c71 = arith.constant 71 : index
    %c0_38 = arith.constant 0 : index
    %48 = vector.load %arg11[%c71, %c0_38] : memref<80x128xf32, #tpu.memory_space<vmem>>, vector<8x128xf32>
    tpu.vector_store %arg11[%c71, %c0_38], %47 {strides = array<i32>} : memref<80x128xf32, #tpu.memory_space<vmem>>, vector<8x128xf32>,
    %c0_39 = arith.constant 0 : index
    %c0_40 = arith.constant 0 : index
    %49 = tpu.strided_load %arg11[%c0_39, %c0_40] {strides = array<i32: 2, 1>} : memref<80x128xf32, #tpu.memory_space<vmem>>, vector<4x128xf32>
    %c10 = arith.constant 10 : index
    %c0_41 = arith.constant 0 : index
    %50 = tpu.strided_load %arg11[%c10, %c0_41] {strides = array<i32: 2, 1>} : memref<80x128xf32, #tpu.memory_space<vmem>>, vector<4x128xf32>
    %c20 = arith.constant 20 : index
    %c0_42 = arith.constant 0 : index
    %51 = tpu.strided_load %arg11[%c20, %c0_42] {strides = array<i32: 2, 1>} : memref<80x128xf32, #tpu.memory_space<vmem>>, vector<4x128xf32>
    %c30 = arith.constant 30 : index
    %c0_43 = arith.constant 0 : index
    %52 = tpu.strided_load %arg11[%c30, %c0_43] {strides = array<i32: 2, 1>} : memref<80x128xf32, #tpu.memory_space<vmem>>, vector<4x128xf32>
    %c40 = arith.constant 40 : index
    %c0_44 = arith.constant 0 : index
    %53 = tpu.strided_load %arg11[%c40, %c0_44] {strides = array<i32: 2, 1>} : memref<80x128xf32, #tpu.memory_space<vmem>>, vector<4x128xf32>
    %c50 = arith.constant 50 : index
    %c0_45 = arith.constant 0 : index
    %54 = tpu.strided_load %arg11[%c50, %c0_45] {strides = array<i32: 2, 1>} : memref<80x128xf32, #tpu.memory_space<vmem>>, vector<4x128xf32>
    %c60 = arith.constant 60 : index
    %c0_46 = arith.constant 0 : index
    %55 = tpu.strided_load %arg11[%c60, %c0_46] {strides = array<i32: 2, 1>} : memref<80x128xf32, #tpu.memory_space<vmem>>, vector<4x128xf32>
    %c70 = arith.constant 70 : index
    %c0_47 = arith.constant 0 : index
    %56 = tpu.strided_load %arg11[%c70, %c0_47] {strides = array<i32: 2, 1>} : memref<80x128xf32, #tpu.memory_space<vmem>>, vector<4x128xf32>
    %57 = tpu.concatenate %49, %50, %51, %52, %53, %54, %55, %56 in 0 : vector<4x128xf32>, vector<4x128xf32>, vector<4x128xf32>, vector<4x128xf32>, vector<4x128xf32>, vector<4x128xf32>, vector<4x128xf32>, vector<4x128xf32> -> vector<32x128xf32>
    %58 = arith.truncf %57 : vector<32x128xf32> to vector<32x128xbf16>
    %c0_48 = arith.constant 0 : index
    %c0_49 = arith.constant 0 : index
    %c0_50 = arith.constant 0 : index
    %59 = vector.load %arg4[%c0_48, %c0_49, %c0_50] : memref<4x128x128xbf16, #tpu.memory_space<vmem>>, vector<1x128x128xbf16>
    %60 = vector.shape_cast %59 : vector<1x128x128xbf16> to vector<128x128xbf16>
    %cst_51 = arith.constant dense<0.000000e+00> : vector<32x128xf32>
    %61 = tpu.matmul %58, %60, %cst_51 {dimension_numbers = #tpu.dot_dimension_numbers<[1], [0], [0], [1], [0, 0, 1, 1], [], []>} : vector<32x128xbf16>, vector<128x128xbf16>, vector<32x128xf32> -> vector<32x128xf32>
    %c1_52 = arith.constant 1 : index
    %c0_53 = arith.constant 0 : index
    %62 = tpu.strided_load %arg11[%c1_52, %c0_53] {strides = array<i32: 2, 1>} : memref<80x128xf32, #tpu.memory_space<vmem>>, vector<4x128xf32>
    %c11_54 = arith.constant 11 : index
    %c0_55 = arith.constant 0 : index
    %63 = tpu.strided_load %arg11[%c11_54, %c0_55] {strides = array<i32: 2, 1>} : memref<80x128xf32, #tpu.memory_space<vmem>>, vector<4x128xf32>
    %c21_56 = arith.constant 21 : index
    %c0_57 = arith.constant 0 : index
    %64 = tpu.strided_load %arg11[%c21_56, %c0_57] {strides = array<i32: 2, 1>} : memref<80x128xf32, #tpu.memory_space<vmem>>, vector<4x128xf32>
    %c31_58 = arith.constant 31 : index
    %c0_59 = arith.constant 0 : index
    %65 = tpu.strided_load %arg11[%c31_58, %c0_59] {strides = array<i32: 2, 1>} : memref<80x128xf32, #tpu.memory_space<vmem>>, vector<4x128xf32>
    %c41_60 = arith.constant 41 : index
    %c0_61 = arith.constant 0 : index
    %66 = tpu.strided_load %arg11[%c41_60, %c0_61] {strides = array<i32: 2, 1>} : memref<80x128xf32, #tpu.memory_space<vmem>>, vector<4x128xf32>
    %c51_62 = arith.constant 51 : index
    %c0_63 = arith.constant 0 : index
    %67 = tpu.strided_load %arg11[%c51_62, %c0_63] {strides = array<i32: 2, 1>} : memref<80x128xf32, #tpu.memory_space<vmem>>, vector<4x128xf32>
    %c61_64 = arith.constant 61 : index
    %c0_65 = arith.constant 0 : index
    %68 = tpu.strided_load %arg11[%c61_64, %c0_65] {strides = array<i32: 2, 1>} : memref<80x128xf32, #tpu.memory_space<vmem>>, vector<4x128xf32>
    %c71_66 = arith.constant 71 : index
    %c0_67 = arith.constant 0 : index
    %69 = tpu.strided_load %arg11[%c71_66, %c0_67] {strides = array<i32: 2, 1>} : memref<80x128xf32, #tpu.memory_space<vmem>>, vector<4x128xf32>
    %70 = tpu.concatenate %62, %63, %64, %65, %66, %67, %68, %69 in 0 : vector<4x128xf32>, vector<4x128xf32>, vector<4x128xf32>, vector<4x128xf32>, vector<4x128xf32>, vector<4x128xf32>, vector<4x128xf32>, vector<4x128xf32> -> vector<32x128xf32>
    %71 = arith.truncf %70 : vector<32x128xf32> to vector<32x128xbf16>
    %c1_68 = arith.constant 1 : index
    %c0_69 = arith.constant 0 : index
    %c0_70 = arith.constant 0 : index
    %72 = vector.load %arg4[%c1_68, %c0_69, %c0_70] : memref<4x128x128xbf16, #tpu.memory_space<vmem>>, vector<1x128x128xbf16>
    %73 = vector.shape_cast %72 : vector<1x128x128xbf16> to vector<128x128xbf16>
    %cst_71 = arith.constant dense<0.000000e+00> : vector<32x128xf32>
    %74 = tpu.matmul %71, %73, %cst_71 {dimension_numbers = #tpu.dot_dimension_numbers<[1], [0], [0], [1], [0, 0, 1, 1], [], []>} : vector<32x128xbf16>, vector<128x128xbf16>, vector<32x128xf32> -> vector<32x128xf32>
    %75 = arith.addf %61, %74 : vector<32x128xf32>
    %c2_72 = arith.constant 2 : index
    %c0_73 = arith.constant 0 : index
    %76 = tpu.strided_load %arg11[%c2_72, %c0_73] {strides = array<i32: 2, 1>} : memref<80x128xf32, #tpu.memory_space<vmem>>, vector<4x128xf32>
    %c12 = arith.constant 12 : index
    %c0_74 = arith.constant 0 : index
    %77 = tpu.strided_load %arg11[%c12, %c0_74] {strides = array<i32: 2, 1>} : memref<80x128xf32, #tpu.memory_space<vmem>>, vector<4x128xf32>
    %c22 = arith.constant 22 : index
    %c0_75 = arith.constant 0 : index
    %78 = tpu.strided_load %arg11[%c22, %c0_75] {strides = array<i32: 2, 1>} : memref<80x128xf32, #tpu.memory_space<vmem>>, vector<4x128xf32>
    %c32 = arith.constant 32 : index
    %c0_76 = arith.constant 0 : index
    %79 = tpu.strided_load %arg11[%c32, %c0_76] {strides = array<i32: 2, 1>} : memref<80x128xf32, #tpu.memory_space<vmem>>, vector<4x128xf32>
    %c42 = arith.constant 42 : index
    %c0_77 = arith.constant 0 : index
    %80 = tpu.strided_load %arg11[%c42, %c0_77] {strides = array<i32: 2, 1>} : memref<80x128xf32, #tpu.memory_space<vmem>>, vector<4x128xf32>
    %c52 = arith.constant 52 : index
    %c0_78 = arith.constant 0 : index
    %81 = tpu.strided_load %arg11[%c52, %c0_78] {strides = array<i32: 2, 1>} : memref<80x128xf32, #tpu.memory_space<vmem>>, vector<4x128xf32>
    %c62 = arith.constant 62 : index
    %c0_79 = arith.constant 0 : index
    %82 = tpu.strided_load %arg11[%c62, %c0_79] {strides = array<i32: 2, 1>} : memref<80x128xf32, #tpu.memory_space<vmem>>, vector<4x128xf32>
    %c72 = arith.constant 72 : index
    %c0_80 = arith.constant 0 : index
    %83 = tpu.strided_load %arg11[%c72, %c0_80] {strides = array<i32: 2, 1>} : memref<80x128xf32, #tpu.memory_space<vmem>>, vector<4x128xf32>
    %84 = tpu.concatenate %76, %77, %78, %79, %80, %81, %82, %83 in 0 : vector<4x128xf32>, vector<4x128xf32>, vector<4x128xf32>, vector<4x128xf32>, vector<4x128xf32>, vector<4x128xf32>, vector<4x128xf32>, vector<4x128xf32> -> vector<32x128xf32>
    %85 = arith.truncf %84 : vector<32x128xf32> to vector<32x128xbf16>
    %c2_81 = arith.constant 2 : index
    %c0_82 = arith.constant 0 : index
    %c0_83 = arith.constant 0 : index
    %86 = vector.load %arg4[%c2_81, %c0_82, %c0_83] : memref<4x128x128xbf16, #tpu.memory_space<vmem>>, vector<1x128x128xbf16>
    %87 = vector.shape_cast %86 : vector<1x128x128xbf16> to vector<128x128xbf16>
    %cst_84 = arith.constant dense<0.000000e+00> : vector<32x128xf32>
    %88 = tpu.matmul %85, %87, %cst_84 {dimension_numbers = #tpu.dot_dimension_numbers<[1], [0], [0], [1], [0, 0, 1, 1], [], []>} : vector<32x128xbf16>, vector<128x128xbf16>, vector<32x128xf32> -> vector<32x128xf32>
    %89 = arith.addf %75, %88 : vector<32x128xf32>
    %c3_85 = arith.constant 3 : index
    %c0_86 = arith.constant 0 : index
    %90 = tpu.strided_load %arg11[%c3_85, %c0_86] {strides = array<i32: 2, 1>} : memref<80x128xf32, #tpu.memory_space<vmem>>, vector<4x128xf32>
    %c13 = arith.constant 13 : index
    %c0_87 = arith.constant 0 : index
    %91 = tpu.strided_load %arg11[%c13, %c0_87] {strides = array<i32: 2, 1>} : memref<80x128xf32, #tpu.memory_space<vmem>>, vector<4x128xf32>
    %c23 = arith.constant 23 : index
    %c0_88 = arith.constant 0 : index
    %92 = tpu.strided_load %arg11[%c23, %c0_88] {strides = array<i32: 2, 1>} : memref<80x128xf32, #tpu.memory_space<vmem>>, vector<4x128xf32>
    %c33 = arith.constant 33 : index
    %c0_89 = arith.constant 0 : index
    %93 = tpu.strided_load %arg11[%c33, %c0_89] {strides = array<i32: 2, 1>} : memref<80x128xf32, #tpu.memory_space<vmem>>, vector<4x128xf32>
    %c43 = arith.constant 43 : index
    %c0_90 = arith.constant 0 : index
    %94 = tpu.strided_load %arg11[%c43, %c0_90] {strides = array<i32: 2, 1>} : memref<80x128xf32, #tpu.memory_space<vmem>>, vector<4x128xf32>
    %c53 = arith.constant 53 : index
    %c0_91 = arith.constant 0 : index
    %95 = tpu.strided_load %arg11[%c53, %c0_91] {strides = array<i32: 2, 1>} : memref<80x128xf32, #tpu.memory_space<vmem>>, vector<4x128xf32>
    %c63 = arith.constant 63 : index
    %c0_92 = arith.constant 0 : index
    %96 = tpu.strided_load %arg11[%c63, %c0_92] {strides = array<i32: 2, 1>} : memref<80x128xf32, #tpu.memory_space<vmem>>, vector<4x128xf32>
    %c73 = arith.constant 73 : index
    %c0_93 = arith.constant 0 : index
    %97 = tpu.strided_load %arg11[%c73, %c0_93] {strides = array<i32: 2, 1>} : memref<80x128xf32, #tpu.memory_space<vmem>>, vector<4x128xf32>
    %98 = tpu.concatenate %90, %91, %92, %93, %94, %95, %96, %97 in 0 : vector<4x128xf32>, vector<4x128xf32>, vector<4x128xf32>, vector<4x128xf32>, vector<4x128xf32>, vector<4x128xf32>, vector<4x128xf32>, vector<4x128xf32> -> vector<32x128xf32>
    %99 = arith.truncf %98 : vector<32x128xf32> to vector<32x128xbf16>
    %c3_94 = arith.constant 3 : index
    %c0_95 = arith.constant 0 : index
    %c0_96 = arith.constant 0 : index
    %100 = vector.load %arg4[%c3_94, %c0_95, %c0_96] : memref<4x128x128xbf16, #tpu.memory_space<vmem>>, vector<1x128x128xbf16>
    %101 = vector.shape_cast %100 : vector<1x128x128xbf16> to vector<128x128xbf16>
    %cst_97 = arith.constant dense<0.000000e+00> : vector<32x128xf32>
    %102 = tpu.matmul %99, %101, %cst_97 {dimension_numbers = #tpu.dot_dimension_numbers<[1], [0], [0], [1], [0, 0, 1, 1], [], []>} : vector<32x128xbf16>, vector<128x128xbf16>, vector<32x128xf32> -> vector<32x128xf32>
    %103 = arith.addf %89, %102 : vector<32x128xf32>
    %c0_98 = arith.constant 0 : index
    %c0_99 = arith.constant 0 : index
    %104 = vector.load %arg5[%c0_98, %c0_99] : memref<1x128xf32, #tpu.memory_space<vmem>>, vector<1x128xf32>
    %105 = vector.broadcast %104 : vector<1x128xf32> to vector<32x128xf32>
    %106 = arith.addf %103, %105 : vector<32x128xf32>
    %cst_100 = arith.constant 0.000000e+00 : f32
    %107 = vector.broadcast %cst_100 : f32 to vector<32x128xf32>
    %108 = arith.cmpf ogt, %106, %107 : vector<32x128xf32>
    %cst_101 = arith.constant 2.000000e-01 : f32
    %109 = vector.broadcast %cst_101 : f32 to vector<32x128xf32>
    %110 = arith.mulf %109, %106 : vector<32x128xf32>
    %111 = arith.select %108, %106, %110 : vector<32x128xi1>, vector<32x128xf32>
    %cst_102 = arith.constant 0.000000e+00 : f32
    %112 = vector.broadcast %cst_102 : f32 to vector<48x128xf32>
    %c0_103 = arith.constant 0 : index
    %c0_104 = arith.constant 0 : index
    %113 = vector.load %arg12[%c0_103, %c0_104] : memref<48x128xf32, #tpu.memory_space<vmem>>, vector<48x128xf32>
    tpu.vector_store %arg12[%c0_103, %c0_104], %112 {strides = array<i32>} : memref<48x128xf32, #tpu.memory_space<vmem>>, vector<48x128xf32>,
    %114 = vector.extract_strided_slice %111 {offsets = [0, 0], sizes = [4, 128], strides = [1, 1]} : vector<32x128xf32> to vector<4x128xf32>
    %c1_105 = arith.constant 1 : index
    %c0_106 = arith.constant 0 : index
    %115 = vector.load %arg12[%c1_105, %c0_106] : memref<48x128xf32, #tpu.memory_space<vmem>>, vector<4x128xf32>
    tpu.vector_store %arg12[%c1_105, %c0_106], %114 {strides = array<i32>} : memref<48x128xf32, #tpu.memory_space<vmem>>, vector<4x128xf32>,
    %116 = vector.extract_strided_slice %111 {offsets = [4, 0], sizes = [4, 128], strides = [1, 1]} : vector<32x128xf32> to vector<4x128xf32>
    %c7 = arith.constant 7 : index
    %c0_107 = arith.constant 0 : index
    %117 = vector.load %arg12[%c7, %c0_107] : memref<48x128xf32, #tpu.memory_space<vmem>>, vector<4x128xf32>
    tpu.vector_store %arg12[%c7, %c0_107], %116 {strides = array<i32>} : memref<48x128xf32, #tpu.memory_space<vmem>>, vector<4x128xf32>,
    %118 = vector.extract_strided_slice %111 {offsets = [8, 0], sizes = [4, 128], strides = [1, 1]} : vector<32x128xf32> to vector<4x128xf32>
    %c13_108 = arith.constant 13 : index
    %c0_109 = arith.constant 0 : index
    %119 = vector.load %arg12[%c13_108, %c0_109] : memref<48x128xf32, #tpu.memory_space<vmem>>, vector<4x128xf32>
    tpu.vector_store %arg12[%c13_108, %c0_109], %118 {strides = array<i32>} : memref<48x128xf32, #tpu.memory_space<vmem>>, vector<4x128xf32>,
    %120 = vector.extract_strided_slice %111 {offsets = [12, 0], sizes = [4, 128], strides = [1, 1]} : vector<32x128xf32> to vector<4x128xf32>
    %c19 = arith.constant 19 : index
    %c0_110 = arith.constant 0 : index
    %121 = vector.load %arg12[%c19, %c0_110] : memref<48x128xf32, #tpu.memory_space<vmem>>, vector<4x128xf32>
    tpu.vector_store %arg12[%c19, %c0_110], %120 {strides = array<i32>} : memref<48x128xf32, #tpu.memory_space<vmem>>, vector<4x128xf32>,
    %122 = vector.extract_strided_slice %111 {offsets = [16, 0], sizes = [4, 128], strides = [1, 1]} : vector<32x128xf32> to vector<4x128xf32>
    %c25 = arith.constant 25 : index
    %c0_111 = arith.constant 0 : index
    %123 = vector.load %arg12[%c25, %c0_111] : memref<48x128xf32, #tpu.memory_space<vmem>>, vector<4x128xf32>
    tpu.vector_store %arg12[%c25, %c0_111], %122 {strides = array<i32>} : memref<48x128xf32, #tpu.memory_space<vmem>>, vector<4x128xf32>,
    %124 = vector.extract_strided_slice %111 {offsets = [20, 0], sizes = [4, 128], strides = [1, 1]} : vector<32x128xf32> to vector<4x128xf32>
    %c31_112 = arith.constant 31 : index
    %c0_113 = arith.constant 0 : index
    %125 = vector.load %arg12[%c31_112, %c0_113] : memref<48x128xf32, #tpu.memory_space<vmem>>, vector<4x128xf32>
    tpu.vector_store %arg12[%c31_112, %c0_113], %124 {strides = array<i32>} : memref<48x128xf32, #tpu.memory_space<vmem>>, vector<4x128xf32>,
    %126 = vector.extract_strided_slice %111 {offsets = [24, 0], sizes = [4, 128], strides = [1, 1]} : vector<32x128xf32> to vector<4x128xf32>
    %c37 = arith.constant 37 : index
    %c0_114 = arith.constant 0 : index
    %127 = vector.load %arg12[%c37, %c0_114] : memref<48x128xf32, #tpu.memory_space<vmem>>, vector<4x128xf32>
    tpu.vector_store %arg12[%c37, %c0_114], %126 {strides = array<i32>} : memref<48x128xf32, #tpu.memory_space<vmem>>, vector<4x128xf32>,
    %128 = vector.extract_strided_slice %111 {offsets = [28, 0], sizes = [4, 128], strides = [1, 1]} : vector<32x128xf32> to vector<4x128xf32>
    %c43_115 = arith.constant 43 : index
    %c0_116 = arith.constant 0 : index
    %129 = vector.load %arg12[%c43_115, %c0_116] : memref<48x128xf32, #tpu.memory_space<vmem>>, vector<4x128xf32>
    tpu.vector_store %arg12[%c43_115, %c0_116], %128 {strides = array<i32>} : memref<48x128xf32, #tpu.memory_space<vmem>>, vector<4x128xf32>,
    %c0_117 = arith.constant 0 : index
    %c0_118 = arith.constant 0 : index
    %130 = tpu.strided_load %arg12[%c0_117, %c0_118] {strides = array<i32: 2, 1>} : memref<48x128xf32, #tpu.memory_space<vmem>>, vector<2x128xf32>
    %c6 = arith.constant 6 : index
    %c0_119 = arith.constant 0 : index
    %131 = tpu.strided_load %arg12[%c6, %c0_119] {strides = array<i32: 2, 1>} : memref<48x128xf32, #tpu.memory_space<vmem>>, vector<2x128xf32>
    %c12_120 = arith.constant 12 : index
    %c0_121 = arith.constant 0 : index
    %132 = tpu.strided_load %arg12[%c12_120, %c0_121] {strides = array<i32: 2, 1>} : memref<48x128xf32, #tpu.memory_space<vmem>>, vector<2x128xf32>
    %c18 = arith.constant 18 : index
    %c0_122 = arith.constant 0 : index
    %133 = tpu.strided_load %arg12[%c18, %c0_122] {strides = array<i32: 2, 1>} : memref<48x128xf32, #tpu.memory_space<vmem>>, vector<2x128xf32>
    %c24 = arith.constant 24 : index
    %c0_123 = arith.constant 0 : index
    %134 = tpu.strided_load %arg12[%c24, %c0_123] {strides = array<i32: 2, 1>} : memref<48x128xf32, #tpu.memory_space<vmem>>, vector<2x128xf32>
    %c30_124 = arith.constant 30 : index
    %c0_125 = arith.constant 0 : index
    %135 = tpu.strided_load %arg12[%c30_124, %c0_125] {strides = array<i32: 2, 1>} : memref<48x128xf32, #tpu.memory_space<vmem>>, vector<2x128xf32>
    %c36 = arith.constant 36 : index
    %c0_126 = arith.constant 0 : index
    %136 = tpu.strided_load %arg12[%c36, %c0_126] {strides = array<i32: 2, 1>} : memref<48x128xf32, #tpu.memory_space<vmem>>, vector<2x128xf32>
    %c42_127 = arith.constant 42 : index
    %c0_128 = arith.constant 0 : index
    %137 = tpu.strided_load %arg12[%c42_127, %c0_128] {strides = array<i32: 2, 1>} : memref<48x128xf32, #tpu.memory_space<vmem>>, vector<2x128xf32>
    %138 = tpu.concatenate %130, %131, %132, %133, %134, %135, %136, %137 in 0 : vector<2x128xf32>, vector<2x128xf32>, vector<2x128xf32>, vector<2x128xf32>, vector<2x128xf32>, vector<2x128xf32>, vector<2x128xf32>, vector<2x128xf32> -> vector<16x128xf32>
    %139 = arith.truncf %138 : vector<16x128xf32> to vector<16x128xbf16>
    %c0_129 = arith.constant 0 : index
    %c0_130 = arith.constant 0 : index
    %c0_131 = arith.constant 0 : index
    %140 = vector.load %arg6[%c0_129, %c0_130, %c0_131] : memref<4x128x128xbf16, #tpu.memory_space<vmem>>, vector<1x128x128xbf16>
    %141 = vector.shape_cast %140 : vector<1x128x128xbf16> to vector<128x128xbf16>
    %cst_132 = arith.constant dense<0.000000e+00> : vector<16x128xf32>
    %142 = tpu.matmul %139, %141, %cst_132 {dimension_numbers = #tpu.dot_dimension_numbers<[1], [0], [0], [1], [0, 0, 1, 1], [], []>} : vector<16x128xbf16>, vector<128x128xbf16>, vector<16x128xf32> -> vector<16x128xf32>
    %c1_133 = arith.constant 1 : index
    %c0_134 = arith.constant 0 : index
    %143 = tpu.strided_load %arg12[%c1_133, %c0_134] {strides = array<i32: 2, 1>} : memref<48x128xf32, #tpu.memory_space<vmem>>, vector<2x128xf32>
    %c7_135 = arith.constant 7 : index
    %c0_136 = arith.constant 0 : index
    %144 = tpu.strided_load %arg12[%c7_135, %c0_136] {strides = array<i32: 2, 1>} : memref<48x128xf32, #tpu.memory_space<vmem>>, vector<2x128xf32>
    %c13_137 = arith.constant 13 : index
    %c0_138 = arith.constant 0 : index
    %145 = tpu.strided_load %arg12[%c13_137, %c0_138] {strides = array<i32: 2, 1>} : memref<48x128xf32, #tpu.memory_space<vmem>>, vector<2x128xf32>
    %c19_139 = arith.constant 19 : index
    %c0_140 = arith.constant 0 : index
    %146 = tpu.strided_load %arg12[%c19_139, %c0_140] {strides = array<i32: 2, 1>} : memref<48x128xf32, #tpu.memory_space<vmem>>, vector<2x128xf32>
    %c25_141 = arith.constant 25 : index
    %c0_142 = arith.constant 0 : index
    %147 = tpu.strided_load %arg12[%c25_141, %c0_142] {strides = array<i32: 2, 1>} : memref<48x128xf32, #tpu.memory_space<vmem>>, vector<2x128xf32>
    %c31_143 = arith.constant 31 : index
    %c0_144 = arith.constant 0 : index
    %148 = tpu.strided_load %arg12[%c31_143, %c0_144] {strides = array<i32: 2, 1>} : memref<48x128xf32, #tpu.memory_space<vmem>>, vector<2x128xf32>
    %c37_145 = arith.constant 37 : index
    %c0_146 = arith.constant 0 : index
    %149 = tpu.strided_load %arg12[%c37_145, %c0_146] {strides = array<i32: 2, 1>} : memref<48x128xf32, #tpu.memory_space<vmem>>, vector<2x128xf32>
    %c43_147 = arith.constant 43 : index
    %c0_148 = arith.constant 0 : index
    %150 = tpu.strided_load %arg12[%c43_147, %c0_148] {strides = array<i32: 2, 1>} : memref<48x128xf32, #tpu.memory_space<vmem>>, vector<2x128xf32>
    %151 = tpu.concatenate %143, %144, %145, %146, %147, %148, %149, %150 in 0 : vector<2x128xf32>, vector<2x128xf32>, vector<2x128xf32>, vector<2x128xf32>, vector<2x128xf32>, vector<2x128xf32>, vector<2x128xf32>, vector<2x128xf32> -> vector<16x128xf32>
    %152 = arith.truncf %151 : vector<16x128xf32> to vector<16x128xbf16>
    %c1_149 = arith.constant 1 : index
    %c0_150 = arith.constant 0 : index
    %c0_151 = arith.constant 0 : index
    %153 = vector.load %arg6[%c1_149, %c0_150, %c0_151] : memref<4x128x128xbf16, #tpu.memory_space<vmem>>, vector<1x128x128xbf16>
    %154 = vector.shape_cast %153 : vector<1x128x128xbf16> to vector<128x128xbf16>
    %cst_152 = arith.constant dense<0.000000e+00> : vector<16x128xf32>
    %155 = tpu.matmul %152, %154, %cst_152 {dimension_numbers = #tpu.dot_dimension_numbers<[1], [0], [0], [1], [0, 0, 1, 1], [], []>} : vector<16x128xbf16>, vector<128x128xbf16>, vector<16x128xf32> -> vector<16x128xf32>
    %156 = arith.addf %142, %155 : vector<16x128xf32>
    %c2_153 = arith.constant 2 : index
    %c0_154 = arith.constant 0 : index
    %157 = tpu.strided_load %arg12[%c2_153, %c0_154] {strides = array<i32: 2, 1>} : memref<48x128xf32, #tpu.memory_space<vmem>>, vector<2x128xf32>
    %c8 = arith.constant 8 : index
    %c0_155 = arith.constant 0 : index
    %158 = tpu.strided_load %arg12[%c8, %c0_155] {strides = array<i32: 2, 1>} : memref<48x128xf32, #tpu.memory_space<vmem>>, vector<2x128xf32>
    %c14 = arith.constant 14 : index
    %c0_156 = arith.constant 0 : index
    %159 = tpu.strided_load %arg12[%c14, %c0_156] {strides = array<i32: 2, 1>} : memref<48x128xf32, #tpu.memory_space<vmem>>, vector<2x128xf32>
    %c20_157 = arith.constant 20 : index
    %c0_158 = arith.constant 0 : index
    %160 = tpu.strided_load %arg12[%c20_157, %c0_158] {strides = array<i32: 2, 1>} : memref<48x128xf32, #tpu.memory_space<vmem>>, vector<2x128xf32>
    %c26 = arith.constant 26 : index
    %c0_159 = arith.constant 0 : index
    %161 = tpu.strided_load %arg12[%c26, %c0_159] {strides = array<i32: 2, 1>} : memref<48x128xf32, #tpu.memory_space<vmem>>, vector<2x128xf32>
    %c32_160 = arith.constant 32 : index
    %c0_161 = arith.constant 0 : index
    %162 = tpu.strided_load %arg12[%c32_160, %c0_161] {strides = array<i32: 2, 1>} : memref<48x128xf32, #tpu.memory_space<vmem>>, vector<2x128xf32>
    %c38 = arith.constant 38 : index
    %c0_162 = arith.constant 0 : index
    %163 = tpu.strided_load %arg12[%c38, %c0_162] {strides = array<i32: 2, 1>} : memref<48x128xf32, #tpu.memory_space<vmem>>, vector<2x128xf32>
    %c44 = arith.constant 44 : index
    %c0_163 = arith.constant 0 : index
    %164 = tpu.strided_load %arg12[%c44, %c0_163] {strides = array<i32: 2, 1>} : memref<48x128xf32, #tpu.memory_space<vmem>>, vector<2x128xf32>
    %165 = tpu.concatenate %157, %158, %159, %160, %161, %162, %163, %164 in 0 : vector<2x128xf32>, vector<2x128xf32>, vector<2x128xf32>, vector<2x128xf32>, vector<2x128xf32>, vector<2x128xf32>, vector<2x128xf32>, vector<2x128xf32> -> vector<16x128xf32>
    %166 = arith.truncf %165 : vector<16x128xf32> to vector<16x128xbf16>
    %c2_164 = arith.constant 2 : index
    %c0_165 = arith.constant 0 : index
    %c0_166 = arith.constant 0 : index
    %167 = vector.load %arg6[%c2_164, %c0_165, %c0_166] : memref<4x128x128xbf16, #tpu.memory_space<vmem>>, vector<1x128x128xbf16>
    %168 = vector.shape_cast %167 : vector<1x128x128xbf16> to vector<128x128xbf16>
    %cst_167 = arith.constant dense<0.000000e+00> : vector<16x128xf32>
    %169 = tpu.matmul %166, %168, %cst_167 {dimension_numbers = #tpu.dot_dimension_numbers<[1], [0], [0], [1], [0, 0, 1, 1], [], []>} : vector<16x128xbf16>, vector<128x128xbf16>, vector<16x128xf32> -> vector<16x128xf32>
    %170 = arith.addf %156, %169 : vector<16x128xf32>
    %c3_168 = arith.constant 3 : index
    %c0_169 = arith.constant 0 : index
    %171 = tpu.strided_load %arg12[%c3_168, %c0_169] {strides = array<i32: 2, 1>} : memref<48x128xf32, #tpu.memory_space<vmem>>, vector<2x128xf32>
    %c9 = arith.constant 9 : index
    %c0_170 = arith.constant 0 : index
    %172 = tpu.strided_load %arg12[%c9, %c0_170] {strides = array<i32: 2, 1>} : memref<48x128xf32, #tpu.memory_space<vmem>>, vector<2x128xf32>
    %c15 = arith.constant 15 : index
    %c0_171 = arith.constant 0 : index
    %173 = tpu.strided_load %arg12[%c15, %c0_171] {strides = array<i32: 2, 1>} : memref<48x128xf32, #tpu.memory_space<vmem>>, vector<2x128xf32>
    %c21_172 = arith.constant 21 : index
    %c0_173 = arith.constant 0 : index
    %174 = tpu.strided_load %arg12[%c21_172, %c0_173] {strides = array<i32: 2, 1>} : memref<48x128xf32, #tpu.memory_space<vmem>>, vector<2x128xf32>
    %c27 = arith.constant 27 : index
    %c0_174 = arith.constant 0 : index
    %175 = tpu.strided_load %arg12[%c27, %c0_174] {strides = array<i32: 2, 1>} : memref<48x128xf32, #tpu.memory_space<vmem>>, vector<2x128xf32>
    %c33_175 = arith.constant 33 : index
    %c0_176 = arith.constant 0 : index
    %176 = tpu.strided_load %arg12[%c33_175, %c0_176] {strides = array<i32: 2, 1>} : memref<48x128xf32, #tpu.memory_space<vmem>>, vector<2x128xf32>
    %c39 = arith.constant 39 : index
    %c0_177 = arith.constant 0 : index
    %177 = tpu.strided_load %arg12[%c39, %c0_177] {strides = array<i32: 2, 1>} : memref<48x128xf32, #tpu.memory_space<vmem>>, vector<2x128xf32>
    %c45 = arith.constant 45 : index
    %c0_178 = arith.constant 0 : index
    %178 = tpu.strided_load %arg12[%c45, %c0_178] {strides = array<i32: 2, 1>} : memref<48x128xf32, #tpu.memory_space<vmem>>, vector<2x128xf32>
    %179 = tpu.concatenate %171, %172, %173, %174, %175, %176, %177, %178 in 0 : vector<2x128xf32>, vector<2x128xf32>, vector<2x128xf32>, vector<2x128xf32>, vector<2x128xf32>, vector<2x128xf32>, vector<2x128xf32>, vector<2x128xf32> -> vector<16x128xf32>
    %180 = arith.truncf %179 : vector<16x128xf32> to vector<16x128xbf16>
    %c3_179 = arith.constant 3 : index
    %c0_180 = arith.constant 0 : index
    %c0_181 = arith.constant 0 : index
    %181 = vector.load %arg6[%c3_179, %c0_180, %c0_181] : memref<4x128x128xbf16, #tpu.memory_space<vmem>>, vector<1x128x128xbf16>
    %182 = vector.shape_cast %181 : vector<1x128x128xbf16> to vector<128x128xbf16>
    %cst_182 = arith.constant dense<0.000000e+00> : vector<16x128xf32>
    %183 = tpu.matmul %180, %182, %cst_182 {dimension_numbers = #tpu.dot_dimension_numbers<[1], [0], [0], [1], [0, 0, 1, 1], [], []>} : vector<16x128xbf16>, vector<128x128xbf16>, vector<16x128xf32> -> vector<16x128xf32>
    %184 = arith.addf %170, %183 : vector<16x128xf32>
    %c0_183 = arith.constant 0 : index
    %c0_184 = arith.constant 0 : index
    %185 = vector.load %arg7[%c0_183, %c0_184] : memref<1x128xf32, #tpu.memory_space<vmem>>, vector<1x128xf32>
    %186 = vector.broadcast %185 : vector<1x128xf32> to vector<16x128xf32>
    %187 = arith.addf %184, %186 : vector<16x128xf32>
    %cst_185 = arith.constant 0.000000e+00 : f32
    %188 = vector.broadcast %cst_185 : f32 to vector<16x128xf32>
    %189 = arith.cmpf ogt, %187, %188 : vector<16x128xf32>
    %cst_186 = arith.constant 2.000000e-01 : f32
    %190 = vector.broadcast %cst_186 : f32 to vector<16x128xf32>
    %191 = arith.mulf %190, %187 : vector<16x128xf32>
    %192 = arith.select %189, %187, %191 : vector<16x128xi1>, vector<16x128xf32>
    %c0_187 = arith.constant 0 : index
    %c0_188 = arith.constant 0 : index
    %193 = vector.load %arg8[%c0_187, %c0_188] : memref<2x128xf32, #tpu.memory_space<vmem>>, vector<2x128xf32>
    %194 = vector.extract_strided_slice %192 {offsets = [0, 0], sizes = [2, 128], strides = [1, 1]} : vector<16x128xf32> to vector<2x128xf32>
    %195 = arith.mulf %194, %193 : vector<2x128xf32>
    %cst_189 = arith.constant dense<0.000000e+00> : vector<2xf32>
    %196 = vector.multi_reduction <add>, %195, %cst_189 [1] : vector<2x128xf32> to vector<2xf32>
    %197 = vector.shape_cast %196 : vector<2xf32> to vector<2x1xf32>
    %cst_190 = arith.constant dense<0.000000e+00> : vector<1xf32>
    %198 = vector.multi_reduction <add>, %197, %cst_190 [0] : vector<2x1xf32> to vector<1xf32>
    %199 = vector.shape_cast %198 : vector<1xf32> to vector<1x1xf32>
    %c0_191 = arith.constant 0 : index
    %c0_192 = arith.constant 0 : index
    %200 = vector.load %arg9[%c0_191, %c0_192] : memref<1x1xf32, #tpu.memory_space<vmem>>, vector<1x1xf32>
    %201 = arith.addf %199, %200 : vector<1x1xf32>
    %202 = vector.extract_strided_slice %192 {offsets = [2, 0], sizes = [2, 128], strides = [1, 1]} : vector<16x128xf32> to vector<2x128xf32>
    %203 = arith.mulf %202, %193 : vector<2x128xf32>
    %cst_193 = arith.constant dense<0.000000e+00> : vector<2xf32>
    %204 = vector.multi_reduction <add>, %203, %cst_193 [1] : vector<2x128xf32> to vector<2xf32>
    %205 = vector.shape_cast %204 : vector<2xf32> to vector<2x1xf32>
    %cst_194 = arith.constant dense<0.000000e+00> : vector<1xf32>
    %206 = vector.multi_reduction <add>, %205, %cst_194 [0] : vector<2x1xf32> to vector<1xf32>
    %207 = vector.shape_cast %206 : vector<1xf32> to vector<1x1xf32>
    %c0_195 = arith.constant 0 : index
    %c0_196 = arith.constant 0 : index
    %208 = vector.load %arg9[%c0_195, %c0_196] : memref<1x1xf32, #tpu.memory_space<vmem>>, vector<1x1xf32>
    %209 = arith.addf %207, %208 : vector<1x1xf32>
    %210 = vector.extract_strided_slice %192 {offsets = [4, 0], sizes = [2, 128], strides = [1, 1]} : vector<16x128xf32> to vector<2x128xf32>
    %211 = arith.mulf %210, %193 : vector<2x128xf32>
    %cst_197 = arith.constant dense<0.000000e+00> : vector<2xf32>
    %212 = vector.multi_reduction <add>, %211, %cst_197 [1] : vector<2x128xf32> to vector<2xf32>
    %213 = vector.shape_cast %212 : vector<2xf32> to vector<2x1xf32>
    %cst_198 = arith.constant dense<0.000000e+00> : vector<1xf32>
    %214 = vector.multi_reduction <add>, %213, %cst_198 [0] : vector<2x1xf32> to vector<1xf32>
    %215 = vector.shape_cast %214 : vector<1xf32> to vector<1x1xf32>
    %c0_199 = arith.constant 0 : index
    %c0_200 = arith.constant 0 : index
    %216 = vector.load %arg9[%c0_199, %c0_200] : memref<1x1xf32, #tpu.memory_space<vmem>>, vector<1x1xf32>
    %217 = arith.addf %215, %216 : vector<1x1xf32>
    %218 = vector.extract_strided_slice %192 {offsets = [6, 0], sizes = [2, 128], strides = [1, 1]} : vector<16x128xf32> to vector<2x128xf32>
    %219 = arith.mulf %218, %193 : vector<2x128xf32>
    %cst_201 = arith.constant dense<0.000000e+00> : vector<2xf32>
    %220 = vector.multi_reduction <add>, %219, %cst_201 [1] : vector<2x128xf32> to vector<2xf32>
    %221 = vector.shape_cast %220 : vector<2xf32> to vector<2x1xf32>
    %cst_202 = arith.constant dense<0.000000e+00> : vector<1xf32>
    %222 = vector.multi_reduction <add>, %221, %cst_202 [0] : vector<2x1xf32> to vector<1xf32>
    %223 = vector.shape_cast %222 : vector<1xf32> to vector<1x1xf32>
    %c0_203 = arith.constant 0 : index
    %c0_204 = arith.constant 0 : index
    %224 = vector.load %arg9[%c0_203, %c0_204] : memref<1x1xf32, #tpu.memory_space<vmem>>, vector<1x1xf32>
    %225 = arith.addf %223, %224 : vector<1x1xf32>
    %226 = vector.extract_strided_slice %192 {offsets = [8, 0], sizes = [2, 128], strides = [1, 1]} : vector<16x128xf32> to vector<2x128xf32>
    %227 = arith.mulf %226, %193 : vector<2x128xf32>
    %cst_205 = arith.constant dense<0.000000e+00> : vector<2xf32>
    %228 = vector.multi_reduction <add>, %227, %cst_205 [1] : vector<2x128xf32> to vector<2xf32>
    %229 = vector.shape_cast %228 : vector<2xf32> to vector<2x1xf32>
    %cst_206 = arith.constant dense<0.000000e+00> : vector<1xf32>
    %230 = vector.multi_reduction <add>, %229, %cst_206 [0] : vector<2x1xf32> to vector<1xf32>
    %231 = vector.shape_cast %230 : vector<1xf32> to vector<1x1xf32>
    %c0_207 = arith.constant 0 : index
    %c0_208 = arith.constant 0 : index
    %232 = vector.load %arg9[%c0_207, %c0_208] : memref<1x1xf32, #tpu.memory_space<vmem>>, vector<1x1xf32>
    %233 = arith.addf %231, %232 : vector<1x1xf32>
    %234 = vector.extract_strided_slice %192 {offsets = [10, 0], sizes = [2, 128], strides = [1, 1]} : vector<16x128xf32> to vector<2x128xf32>
    %235 = arith.mulf %234, %193 : vector<2x128xf32>
    %cst_209 = arith.constant dense<0.000000e+00> : vector<2xf32>
    %236 = vector.multi_reduction <add>, %235, %cst_209 [1] : vector<2x128xf32> to vector<2xf32>
    %237 = vector.shape_cast %236 : vector<2xf32> to vector<2x1xf32>
    %cst_210 = arith.constant dense<0.000000e+00> : vector<1xf32>
    %238 = vector.multi_reduction <add>, %237, %cst_210 [0] : vector<2x1xf32> to vector<1xf32>
    %239 = vector.shape_cast %238 : vector<1xf32> to vector<1x1xf32>
    %c0_211 = arith.constant 0 : index
    %c0_212 = arith.constant 0 : index
    %240 = vector.load %arg9[%c0_211, %c0_212] : memref<1x1xf32, #tpu.memory_space<vmem>>, vector<1x1xf32>
    %241 = arith.addf %239, %240 : vector<1x1xf32>
    %242 = vector.extract_strided_slice %192 {offsets = [12, 0], sizes = [2, 128], strides = [1, 1]} : vector<16x128xf32> to vector<2x128xf32>
    %243 = arith.mulf %242, %193 : vector<2x128xf32>
    %cst_213 = arith.constant dense<0.000000e+00> : vector<2xf32>
    %244 = vector.multi_reduction <add>, %243, %cst_213 [1] : vector<2x128xf32> to vector<2xf32>
    %245 = vector.shape_cast %244 : vector<2xf32> to vector<2x1xf32>
    %cst_214 = arith.constant dense<0.000000e+00> : vector<1xf32>
    %246 = vector.multi_reduction <add>, %245, %cst_214 [0] : vector<2x1xf32> to vector<1xf32>
    %247 = vector.shape_cast %246 : vector<1xf32> to vector<1x1xf32>
    %c0_215 = arith.constant 0 : index
    %c0_216 = arith.constant 0 : index
    %248 = vector.load %arg9[%c0_215, %c0_216] : memref<1x1xf32, #tpu.memory_space<vmem>>, vector<1x1xf32>
    %249 = arith.addf %247, %248 : vector<1x1xf32>
    %250 = vector.extract_strided_slice %192 {offsets = [14, 0], sizes = [2, 128], strides = [1, 1]} : vector<16x128xf32> to vector<2x128xf32>
    %251 = arith.mulf %250, %193 : vector<2x128xf32>
    %cst_217 = arith.constant dense<0.000000e+00> : vector<2xf32>
    %252 = vector.multi_reduction <add>, %251, %cst_217 [1] : vector<2x128xf32> to vector<2xf32>
    %253 = vector.shape_cast %252 : vector<2xf32> to vector<2x1xf32>
    %cst_218 = arith.constant dense<0.000000e+00> : vector<1xf32>
    %254 = vector.multi_reduction <add>, %253, %cst_218 [0] : vector<2x1xf32> to vector<1xf32>
    %255 = vector.shape_cast %254 : vector<1xf32> to vector<1x1xf32>
    %c0_219 = arith.constant 0 : index
    %c0_220 = arith.constant 0 : index
    %256 = vector.load %arg9[%c0_219, %c0_220] : memref<1x1xf32, #tpu.memory_space<vmem>>, vector<1x1xf32>
    %257 = arith.addf %255, %256 : vector<1x1xf32>
    %258 = tpu.concatenate %201, %209, %217, %225, %233, %241, %249, %257 in 0 : vector<1x1xf32>, vector<1x1xf32>, vector<1x1xf32>, vector<1x1xf32>, vector<1x1xf32>, vector<1x1xf32>, vector<1x1xf32>, vector<1x1xf32> -> vector<8x1xf32>
    %cst_221 = arith.constant 0.000000e+00 : f32
    %259 = vector.broadcast %cst_221 : f32 to vector<8x1xf32>
    %260 = arith.subf %259, %258 : vector<8x1xf32>
    %261 = math.exp %260 : vector<8x1xf32>
    %cst_222 = arith.constant 1.000000e+00 : f32
    %262 = vector.broadcast %cst_222 : f32 to vector<8x1xf32>
    %263 = arith.addf %262, %261 : vector<8x1xf32>
    %cst_223 = arith.constant 1.000000e+00 : f32
    %264 = vector.broadcast %cst_223 : f32 to vector<8x1xf32>
    %265 = arith.divf %264, %263 : vector<8x1xf32>
    %c0_224 = arith.constant 0 : index
    %c0_225 = arith.constant 0 : index
    %266 = vector.load %arg10[%c0_224, %c0_225] : memref<8x1xf32, #tpu.memory_space<vmem>>, vector<8x1xf32>
    tpu.vector_store %arg10[%c0_224, %c0_225], %265 {strides = array<i32>} : memref<8x1xf32, #tpu.memory_space<vmem>>, vector<8x1xf32>,
    return
  }
  func.func @transform_0(%arg0: i32) -> (i32, i32, i32) {
    %c0_i32 = arith.constant 0 : i32
    %c0_i32_0 = arith.constant 0 : i32
    %c0_i32_1 = arith.constant 0 : i32
    return %c0_i32, %arg0, %c0_i32_0 : i32, i32, i32
  }
  func.func @transform_1(%arg0: i32) -> (i32, i32, i32) {
    %c0_i32 = arith.constant 0 : i32
    %c0_i32_0 = arith.constant 0 : i32
    %c0_i32_1 = arith.constant 0 : i32
    %c0_i32_2 = arith.constant 0 : i32
    return %c0_i32, %c0_i32_0, %c0_i32_1 : i32, i32, i32
  }
  func.func @transform_2(%arg0: i32) -> (i32, i32) {
    %c0_i32 = arith.constant 0 : i32
    %c0_i32_0 = arith.constant 0 : i32
    %c0_i32_1 = arith.constant 0 : i32
    return %c0_i32, %c0_i32_0 : i32, i32
  }
  func.func @transform_3(%arg0: i32) -> (i32, i32, i32) {
    %c0_i32 = arith.constant 0 : i32
    %c0_i32_0 = arith.constant 0 : i32
    %c0_i32_1 = arith.constant 0 : i32
    %c0_i32_2 = arith.constant 0 : i32
    return %c0_i32, %c0_i32_0, %c0_i32_1 : i32, i32, i32
  }
  func.func @transform_4(%arg0: i32) -> (i32, i32) {
    %c0_i32 = arith.constant 0 : i32
    %c0_i32_0 = arith.constant 0 : i32
    %c0_i32_1 = arith.constant 0 : i32
    return %c0_i32, %c0_i32_0 : i32, i32
  }
  func.func @transform_5(%arg0: i32) -> (i32, i32, i32) {
    %c0_i32 = arith.constant 0 : i32
    %c0_i32_0 = arith.constant 0 : i32
    %c0_i32_1 = arith.constant 0 : i32
    %c0_i32_2 = arith.constant 0 : i32
    return %c0_i32, %c0_i32_0, %c0_i32_1 : i32, i32, i32
  }
  func.func @transform_6(%arg0: i32) -> (i32, i32) {
    %c0_i32 = arith.constant 0 : i32
    %c0_i32_0 = arith.constant 0 : i32
    %c0_i32_1 = arith.constant 0 : i32
    return %c0_i32, %c0_i32_0 : i32, i32
  }
  func.func @transform_7(%arg0: i32) -> (i32, i32) {
    %c0_i32 = arith.constant 0 : i32
    %c0_i32_0 = arith.constant 0 : i32
    %c0_i32_1 = arith.constant 0 : i32
    return %c0_i32, %c0_i32_0 : i32, i32
  }
  func.func @transform_8(%arg0: i32) -> (i32, i32) {
    %c0_i32 = arith.constant 0 : i32
    %c0_i32_0 = arith.constant 0 : i32
    %c0_i32_1 = arith.constant 0 : i32
    return %c0_i32, %c0_i32_0 : i32, i32
  }
  func.func @transform_9(%arg0: i32) -> (i32, i32) {
    %c0_i32 = arith.constant 0 : i32
    %c0_i32_0 = arith.constant 0 : i32
    return %arg0, %c0_i32 : i32, i32
  }
}

</mosaic_0001>

<llo_original>
// kernel: image_discriminator_forward.1
$region0: #{image_discriminator_forward.1}
  #allocation0 [shape = 'u32[]', space=smem, size = 0x4, offset = 0x4, fixed_abs, tag = 'smem constant byte address 0x4 - core index']
  #allocation1 [shape = 'u32[72,128]{1,0:T(1,128)}', space=vmem, size = 0x9000, scoped, tag = 'internal scratch']
  #allocation2 [shape = 'f32[80,128]{1,0:T(8,128)}', space=vmem, size = 0xa000, scoped, tag = 'scratch operand']
  #allocation3 [shape = 'f32[48,128]{1,0:T(8,128)}', space=vmem, size = 0x6000, scoped, tag = 'scratch operand']
  #allocation4 [shape = 'f32[1,1]{1,0:T(1,128)S(1)}', space=vmem, size = 0x200, scoped, tag = 'scoped memory for image_discriminator_forward.1']
  %s0 = inlined_call_operand.vmem [shape: bf16[4,64,48], index: 0, kind: input, shape index: {}]
  %s1 = inlined_call_operand.vmem [shape: bf16[4,48,128], index: 1, kind: input, shape index: {}]
  %s2 = inlined_call_operand.vmem [shape: f32[1,128], index: 2, kind: input, shape index: {}]
  %s3 = inlined_call_operand.vmem [shape: bf16[4,128,128], index: 3, kind: input, shape index: {}]
  %s4 = inlined_call_operand.vmem [shape: f32[1,128], index: 4, kind: input, shape index: {}]
  %s5 = inlined_call_operand.vmem [shape: bf16[4,128,128], index: 5, kind: input, shape index: {}]
  %s6 = inlined_call_operand.vmem [shape: f32[1,128], index: 6, kind: input, shape index: {}]
  %s7 = inlined_call_operand.vmem [shape: f32[2,128], index: 7, kind: input, shape index: {}]
  %s8 = inlined_call_operand.<no memory space> [shape: f32[1,1], index: 8, kind: input, shape index: {}]
  %s9 = inlined_call_operand.vmem [shape: f32[8,1], index: 9, kind: output, shape index: {}]
  %s10 = sld [smem:[#allocation0]]
  $region46: #{image_discriminator_forward.1} parent=0
    _
  %s12 = ssub.s32 1, %s10
  %s13 = scalar_select 0, %s12, %s10
  %v14 = vstv %s8
  %15 = vst [vmem:[#allocation4] sm:$0x1] %v14
  // Predicated region
  $region2: #{image_discriminator_forward.1} parent=0 // pred_check
    _
  $region3: #{image_discriminator_forward.1} parent=0 // pred_check_branch
    %17 = sbr.rel (0) target = $region5
  $region4: #{image_discriminator_forward.1} parent=0 // pred_region
    _
  $region5: #{image_discriminator_forward.1} parent=0 // pred_fallthru
    _
  // Predicated region
  $region6: #{image_discriminator_forward.1} parent=0 // pred_check
    _
  $region7: #{image_discriminator_forward.1} parent=0 // pred_check_branch
    %19 = sbr.rel (0) target = $region9
  $region8: #{image_discriminator_forward.1} parent=0 // pred_region
    _
  $region9: #{image_discriminator_forward.1} parent=0 // pred_fallthru
    _
  // Predicated region
  $region10: #{image_discriminator_forward.1} parent=0 // pred_check
    _
  $region11: #{image_discriminator_forward.1} parent=0 // pred_check_branch
    %21 = sbr.rel (0) target = $region13
  $region12: #{image_discriminator_forward.1} parent=0 // pred_region
    _
  $region13: #{image_discriminator_forward.1} parent=0 // pred_fallthru
    _
  // Predicated region
  $region14: #{image_discriminator_forward.1} parent=0 // pred_check
    _
  $region15: #{image_discriminator_forward.1} parent=0 // pred_check_branch
    %23 = sbr.rel (0) target = $region17
  $region16: #{image_discriminator_forward.1} parent=0 // pred_region
    _
  $region17: #{image_discriminator_forward.1} parent=0 // pred_fallthru
    _
  // Predicated region
  $region18: #{image_discriminator_forward.1} parent=0 // pred_check
    _
  $region19: #{image_discriminator_forward.1} parent=0 // pred_check_branch
    %25 = sbr.rel (0) target = $region21
  $region20: #{image_discriminator_forward.1} parent=0 // pred_region
    _
  $region21: #{image_discriminator_forward.1} parent=0 // pred_fallthru
    _
  // Predicated region
  $region22: #{image_discriminator_forward.1} parent=0 // pred_check
    _
  $region23: #{image_discriminator_forward.1} parent=0 // pred_check_branch
    %27 = sbr.rel (0) target = $region25
  $region24: #{image_discriminator_forward.1} parent=0 // pred_region
    _
  $region25: #{image_discriminator_forward.1} parent=0 // pred_fallthru
    _
  // Predicated region
  $region26: #{image_discriminator_forward.1} parent=0 // pred_check
    _
  $region27: #{image_discriminator_forward.1} parent=0 // pred_check_branch
    %29 = sbr.rel (0) target = $region29
  $region28: #{image_discriminator_forward.1} parent=0 // pred_region
    _
  $region29: #{image_discriminator_forward.1} parent=0 // pred_fallthru
    _
  // Predicated region
  $region30: #{image_discriminator_forward.1} parent=0 // pred_check
    _
  $region31: #{image_discriminator_forward.1} parent=0 // pred_check_branch
    %31 = sbr.rel (0) target = $region33
  $region32: #{image_discriminator_forward.1} parent=0 // pred_region
    _
  $region33: #{image_discriminator_forward.1} parent=0 // pred_fallthru
    _
  // Predicated region
  $region34: #{image_discriminator_forward.1} parent=0 // pred_check
    _
  $region35: #{image_discriminator_forward.1} parent=0 // pred_check_branch
    %33 = sbr.rel (0) target = $region37
  $region36: #{image_discriminator_forward.1} parent=0 // pred_region
    _
  $region37: #{image_discriminator_forward.1} parent=0 // pred_fallthru
    _
  %v35 = vld [vmem:[%s0] sm:$0xf]
  %v36 = vld [vmem:[%s0 + $0x4] sm:$0xf]
  %v37 = vld [vmem:[%s0 + $0x8] sm:$0xf]
  %v38 = vld [vmem:[%s0 + $0xc] sm:$0xf]
  %v39 = vld [vmem:[%s0 + $0x10] sm:$0xf]
  %v40 = vld [vmem:[%s0 + $0x14] sm:$0xf]
  %v41 = vld [vmem:[%s0 + $0x18] sm:$0xf]
  %v42 = vld [vmem:[%s0 + $0x1c] sm:$0xf]
  %v43 = vld [vmem:[%s1] sm:$0xf]
  %v44 = vld [vmem:[%s1 + $0x4] sm:$0xf]
  %v45 = vld [vmem:[%s1 + $0x8] sm:$0xf]
  %v46 = vld [vmem:[%s1 + $0xc] sm:$0xf]
  %v47 = vld [vmem:[%s1 + $0x10] sm:$0xf]
  %v48 = vld [vmem:[%s1 + $0x14] sm:$0xf]
  %s49 = scalar_lea.vmem %s0, 32
  %v50 = vld [vmem:[%s49] sm:$0xf]
  %v51 = vld [vmem:[%s49 + $0x4] sm:$0xf]
  %v52 = vld [vmem:[%s49 + $0x8] sm:$0xf]
  %v53 = vld [vmem:[%s49 + $0xc] sm:$0xf]
  %v54 = vld [vmem:[%s49 + $0x10] sm:$0xf]
  %v55 = vld [vmem:[%s49 + $0x14] sm:$0xf]
  %v56 = vld [vmem:[%s49 + $0x18] sm:$0xf]
  %v57 = vld [vmem:[%s49 + $0x1c] sm:$0xf]
  %s58 = scalar_lea.vmem %s1, 24
  %v59 = vld [vmem:[%s58] sm:$0xf]
  %v60 = vld [vmem:[%s58 + $0x4] sm:$0xf]
  %v61 = vld [vmem:[%s58 + $0x8] sm:$0xf]
  %v62 = vld [vmem:[%s58 + $0xc] sm:$0xf]
  %v63 = vld [vmem:[%s58 + $0x10] sm:$0xf]
  %v64 = vld [vmem:[%s58 + $0x14] sm:$0xf]
  %v73 = vunpack.c.l.b16 %v50
  %v74 = vunpack.c.l.b16 %v51
  %v75 = vunpack.c.l.b16 %v52
  %v76 = vunpack.c.l.b16 %v53
  %v77 = vunpack.c.l.b16 %v54
  %v78 = vunpack.c.l.b16 %v55
  %v79 = vunpack.c.l.b16 %v56
  %v80 = vunpack.c.l.b16 %v57
  %v81 = vpack.c.b16 %v74, %v73
  %v82 = vpack.c.b16 %v76, %v75
  %v83 = vpack.c.b16 %v78, %v77
  %v84 = vpack.c.b16 %v80, %v79
  %v91 = vunpack.c.l.b16 %v59
  %v92 = vunpack.c.l.b16 %v60
  %v93 = vunpack.c.l.b16 %v61
  %v94 = vunpack.c.l.b16 %v62
  %v95 = vunpack.c.l.b16 %v63
  %v96 = vunpack.c.l.b16 %v64
  %v97 = vpack.c.b16 %v92, %v91
  %v98 = vpack.c.b16 %v94, %v93
  %v99 = vpack.c.b16 %v96, %v95
  %vm103 = vcmask 392192
  %v105 = vsel %vm103, %v81, 0
  %v108 = vsel %vm103, %v82, 0
  %v111 = vsel %vm103, %v83, 0
  %v114 = vsel %vm103, %v84, 0
  %116 = vmatpush.bf16.msra.mxu0 0
  %117 = vmatpush.bf16.msra.mxu0 0
  %118 = vmatpush.bf16.msra.mxu0 0
  %119 = vmatpush.bf16.msra.mxu0 0
  %120 = vmatpush.bf16.msra.mxu0 0
  %121 = vmatpush.bf16.msra.mxu0 %v99
  %122 = vmatpush.bf16.msra.mxu0 %v98
  %123 = vmatpush.bf16.msra.mxu0 %v97
  %124 = vmatmul.bf16.gmra.mxu0 %v105
  %v125 = vpop.f32.mrf.mxu0
  %v126 = vadd.f32 0.0, %v125
  %v127 = vpop.f32.mrf.mxu0
  %v128 = vadd.f32 0.0, %v127
  %129 = vmatmul.bf16.gmra.mxu0 %v108
  %v130 = vpop.f32.mrf.mxu0
  %v131 = vadd.f32 0.0, %v130
  %v132 = vpop.f32.mrf.mxu0
  %v133 = vadd.f32 0.0, %v132
  %134 = vmatmul.bf16.gmra.mxu0 %v111
  %v135 = vpop.f32.mrf.mxu0
  %v136 = vadd.f32 0.0, %v135
  %v137 = vpop.f32.mrf.mxu0
  %v138 = vadd.f32 0.0, %v137
  %139 = vmatmul.bf16.gmra.mxu0 %v114
  %v140 = vpop.f32.mrf.mxu0
  %v141 = vadd.f32 0.0, %v140
  %v142 = vpop.f32.mrf.mxu0
  %v143 = vadd.f32 0.0, %v142
  %144 = vdwg.mxu0
  %v153 = vunpack.c.l.b16 %v35
  %v154 = vunpack.c.l.b16 %v36
  %v155 = vunpack.c.l.b16 %v37
  %v156 = vunpack.c.l.b16 %v38
  %v157 = vunpack.c.l.b16 %v39
  %v158 = vunpack.c.l.b16 %v40
  %v159 = vunpack.c.l.b16 %v41
  %v160 = vunpack.c.l.b16 %v42
  %v161 = vpack.c.b16 %v154, %v153
  %v162 = vpack.c.b16 %v156, %v155
  %v163 = vpack.c.b16 %v158, %v157
  %v164 = vpack.c.b16 %v160, %v159
  %v171 = vunpack.c.l.b16 %v43
  %v172 = vunpack.c.l.b16 %v44
  %v173 = vunpack.c.l.b16 %v45
  %v174 = vunpack.c.l.b16 %v46
  %v175 = vunpack.c.l.b16 %v47
  %v176 = vunpack.c.l.b16 %v48
  %v177 = vpack.c.b16 %v172, %v171
  %v178 = vpack.c.b16 %v174, %v173
  %v179 = vpack.c.b16 %v176, %v175
  %v184 = vsel %vm103, %v161, 0
  %v187 = vsel %vm103, %v162, 0
  %v190 = vsel %vm103, %v163, 0
  %v193 = vsel %vm103, %v164, 0
  %195 = vmatpush.bf16.msra.mxu0 0
  %196 = vmatpush.bf16.msra.mxu0 0
  %197 = vmatpush.bf16.msra.mxu0 0
  %198 = vmatpush.bf16.msra.mxu0 0
  %199 = vmatpush.bf16.msra.mxu0 0
  %200 = vmatpush.bf16.msra.mxu0 %v179
  %201 = vmatpush.bf16.msra.mxu0 %v178
  %202 = vmatpush.bf16.msra.mxu0 %v177
  %203 = vmatmul.bf16.gmra.mxu0 %v184
  %v204 = vpop.f32.mrf.mxu0
  %v205 = vadd.f32 %v126, %v204
  %v206 = vpop.f32.mrf.mxu0
  %v207 = vadd.f32 %v128, %v206
  %208 = vmatmul.bf16.gmra.mxu0 %v187
  %v209 = vpop.f32.mrf.mxu0
  %v210 = vadd.f32 %v131, %v209
  %v211 = vpop.f32.mrf.mxu0
  %v212 = vadd.f32 %v133, %v211
  %213 = vmatmul.bf16.gmra.mxu0 %v190
  %v214 = vpop.f32.mrf.mxu0
  %v215 = vadd.f32 %v136, %v214
  %v216 = vpop.f32.mrf.mxu0
  %v217 = vadd.f32 %v138, %v216
  %218 = vmatmul.bf16.gmra.mxu0 %v193
  %v219 = vpop.f32.mrf.mxu0
  %v220 = vadd.f32 %v141, %v219
  %v221 = vpop.f32.mrf.mxu0
  %v222 = vadd.f32 %v143, %v221
  %223 = vdwg.mxu0
  %s224 = scalar_lea.vmem %s0, 64
  %v225 = vld [vmem:[%s224] sm:$0xf]
  %v226 = vld [vmem:[%s224 + $0x4] sm:$0xf]
  %v227 = vld [vmem:[%s224 + $0x8] sm:$0xf]
  %v228 = vld [vmem:[%s224 + $0xc] sm:$0xf]
  %v229 = vld [vmem:[%s224 + $0x10] sm:$0xf]
  %v230 = vld [vmem:[%s224 + $0x14] sm:$0xf]
  %v231 = vld [vmem:[%s224 + $0x18] sm:$0xf]
  %v232 = vld [vmem:[%s224 + $0x1c] sm:$0xf]
  %s233 = scalar_lea.vmem %s1, 48
  %v234 = vld [vmem:[%s233] sm:$0xf]
  %v235 = vld [vmem:[%s233 + $0x4] sm:$0xf]
  %v236 = vld [vmem:[%s233 + $0x8] sm:$0xf]
  %v237 = vld [vmem:[%s233 + $0xc] sm:$0xf]
  %v238 = vld [vmem:[%s233 + $0x10] sm:$0xf]
  %v239 = vld [vmem:[%s233 + $0x14] sm:$0xf]
  %v248 = vunpack.c.l.b16 %v225
  %v249 = vunpack.c.l.b16 %v226
  %v250 = vunpack.c.l.b16 %v227
  %v251 = vunpack.c.l.b16 %v228
  %v252 = vunpack.c.l.b16 %v229
  %v253 = vunpack.c.l.b16 %v230
  %v254 = vunpack.c.l.b16 %v231
  %v255 = vunpack.c.l.b16 %v232
  %v256 = vpack.c.b16 %v249, %v248
  %v257 = vpack.c.b16 %v251, %v250
  %v258 = vpack.c.b16 %v253, %v252
  %v259 = vpack.c.b16 %v255, %v254
  %v266 = vunpack.c.l.b16 %v234
  %v267 = vunpack.c.l.b16 %v235
  %v268 = vunpack.c.l.b16 %v236
  %v269 = vunpack.c.l.b16 %v237
  %v270 = vunpack.c.l.b16 %v238
  %v271 = vunpack.c.l.b16 %v239
  %v272 = vpack.c.b16 %v267, %v266
  %v273 = vpack.c.b16 %v269, %v268
  %v274 = vpack.c.b16 %v271, %v270
  %v279 = vsel %vm103, %v256, 0
  %v282 = vsel %vm103, %v257, 0
  %v285 = vsel %vm103, %v258, 0
  %v288 = vsel %vm103, %v259, 0
  %290 = vmatpush.bf16.msra.mxu0 0
  %291 = vmatpush.bf16.msra.mxu0 0
  %292 = vmatpush.bf16.msra.mxu0 0
  %293 = vmatpush.bf16.msra.mxu0 0
  %294 = vmatpush.bf16.msra.mxu0 0
  %295 = vmatpush.bf16.msra.mxu0 %v274
  %296 = vmatpush.bf16.msra.mxu0 %v273
  %297 = vmatpush.bf16.msra.mxu0 %v272
  %298 = vmatmul.bf16.gmra.mxu0 %v279
  %v299 = vpop.f32.mrf.mxu0
  %v300 = vadd.f32 0.0, %v299
  %v301 = vpop.f32.mrf.mxu0
  %v302 = vadd.f32 0.0, %v301
  %303 = vmatmul.bf16.gmra.mxu0 %v282
  %v304 = vpop.f32.mrf.mxu0
  %v305 = vadd.f32 0.0, %v304
  %v306 = vpop.f32.mrf.mxu0
  %v307 = vadd.f32 0.0, %v306
  %308 = vmatmul.bf16.gmra.mxu0 %v285
  %v309 = vpop.f32.mrf.mxu0
  %v310 = vadd.f32 0.0, %v309
  %v311 = vpop.f32.mrf.mxu0
  %v312 = vadd.f32 0.0, %v311
  %313 = vmatmul.bf16.gmra.mxu0 %v288
  %v314 = vpop.f32.mrf.mxu0
  %v315 = vadd.f32 0.0, %v314
  %v316 = vpop.f32.mrf.mxu0
  %v317 = vadd.f32 0.0, %v316
  %318 = vdwg.mxu0
  %v319 = vadd.f32 %v205, %v300
  %v320 = vadd.f32 %v207, %v302
  %v321 = vadd.f32 %v210, %v305
  %v322 = vadd.f32 %v212, %v307
  %v323 = vadd.f32 %v215, %v310
  %v324 = vadd.f32 %v217, %v312
  %v325 = vadd.f32 %v220, %v315
  %v326 = vadd.f32 %v222, %v317
  %s327 = scalar_lea.vmem %s0, 96
  %v328 = vld [vmem:[%s327] sm:$0xf]
  %v329 = vld [vmem:[%s327 + $0x4] sm:$0xf]
  %v330 = vld [vmem:[%s327 + $0x8] sm:$0xf]
  %v331 = vld [vmem:[%s327 + $0xc] sm:$0xf]
  %v332 = vld [vmem:[%s327 + $0x10] sm:$0xf]
  %v333 = vld [vmem:[%s327 + $0x14] sm:$0xf]
  %v334 = vld [vmem:[%s327 + $0x18] sm:$0xf]
  %v335 = vld [vmem:[%s327 + $0x1c] sm:$0xf]
  %s336 = scalar_lea.vmem %s1, 72
  %v337 = vld [vmem:[%s336] sm:$0xf]
  %v338 = vld [vmem:[%s336 + $0x4] sm:$0xf]
  %v339 = vld [vmem:[%s336 + $0x8] sm:$0xf]
  %v340 = vld [vmem:[%s336 + $0xc] sm:$0xf]
  %v341 = vld [vmem:[%s336 + $0x10] sm:$0xf]
  %v342 = vld [vmem:[%s336 + $0x14] sm:$0xf]
  %v351 = vunpack.c.l.b16 %v328
  %v352 = vunpack.c.l.b16 %v329
  %v353 = vunpack.c.l.b16 %v330
  %v354 = vunpack.c.l.b16 %v331
  %v355 = vunpack.c.l.b16 %v332
  %v356 = vunpack.c.l.b16 %v333
  %v357 = vunpack.c.l.b16 %v334
  %v358 = vunpack.c.l.b16 %v335
  %v359 = vpack.c.b16 %v352, %v351
  %v360 = vpack.c.b16 %v354, %v353
  %v361 = vpack.c.b16 %v356, %v355
  %v362 = vpack.c.b16 %v358, %v357
  %v369 = vunpack.c.l.b16 %v337
  %v370 = vunpack.c.l.b16 %v338
  %v371 = vunpack.c.l.b16 %v339
  %v372 = vunpack.c.l.b16 %v340
  %v373 = vunpack.c.l.b16 %v341
  %v374 = vunpack.c.l.b16 %v342
  %v375 = vpack.c.b16 %v370, %v369
  %v376 = vpack.c.b16 %v372, %v371
  %v377 = vpack.c.b16 %v374, %v373
  %v382 = vsel %vm103, %v359, 0
  %v385 = vsel %vm103, %v360, 0
  %v388 = vsel %vm103, %v361, 0
  %v391 = vsel %vm103, %v362, 0
  %393 = vmatpush.bf16.msra.mxu0 0
  %394 = vmatpush.bf16.msra.mxu0 0
  %395 = vmatpush.bf16.msra.mxu0 0
  %396 = vmatpush.bf16.msra.mxu0 0
  %397 = vmatpush.bf16.msra.mxu0 0
  %398 = vmatpush.bf16.msra.mxu0 %v377
  %399 = vmatpush.bf16.msra.mxu0 %v376
  %400 = vmatpush.bf16.msra.mxu0 %v375
  %401 = vmatmul.bf16.gmra.mxu0 %v382
  %v402 = vpop.f32.mrf.mxu0
  %v403 = vadd.f32 0.0, %v402
  %v404 = vpop.f32.mrf.mxu0
  %v405 = vadd.f32 0.0, %v404
  %406 = vmatmul.bf16.gmra.mxu0 %v385
  %v407 = vpop.f32.mrf.mxu0
  %v408 = vadd.f32 0.0, %v407
  %v409 = vpop.f32.mrf.mxu0
  %v410 = vadd.f32 0.0, %v409
  %411 = vmatmul.bf16.gmra.mxu0 %v388
  %v412 = vpop.f32.mrf.mxu0
  %v413 = vadd.f32 0.0, %v412
  %v414 = vpop.f32.mrf.mxu0
  %v415 = vadd.f32 0.0, %v414
  %416 = vmatmul.bf16.gmra.mxu0 %v391
  %v417 = vpop.f32.mrf.mxu0
  %v418 = vadd.f32 0.0, %v417
  %v419 = vpop.f32.mrf.mxu0
  %v420 = vadd.f32 0.0, %v419
  %421 = vdwg.mxu0
  %v422 = vadd.f32 %v319, %v403
  %v423 = vadd.f32 %v320, %v405
  %v424 = vadd.f32 %v321, %v408
  %v425 = vadd.f32 %v322, %v410
  %v426 = vadd.f32 %v323, %v413
  %v427 = vadd.f32 %v324, %v415
  %v428 = vadd.f32 %v325, %v418
  %v429 = vadd.f32 %v326, %v420
  %v430 = vld [vmem:[%s2] sm:$0x1]
  %v432 = vperm.slane %v430, 0
  %v434 = vadd.f32 %v422, %v432
  %v435 = vadd.f32 %v423, %v432
  %v436 = vadd.f32 %v424, %v432
  %v437 = vadd.f32 %v425, %v432
  %v438 = vadd.f32 %v426, %v432
  %v439 = vadd.f32 %v427, %v432
  %v440 = vadd.f32 %v428, %v432
  %v441 = vadd.f32 %v429, %v432
  %vm442 = vcmp.gt.f32.partialorder %v434, 0.0
  %vm443 = vcmp.gt.f32.partialorder %v435, 0.0
  %vm444 = vcmp.gt.f32.partialorder %v436, 0.0
  %vm445 = vcmp.gt.f32.partialorder %v437, 0.0
  %vm446 = vcmp.gt.f32.partialorder %v438, 0.0
  %vm447 = vcmp.gt.f32.partialorder %v439, 0.0
  %vm448 = vcmp.gt.f32.partialorder %v440, 0.0
  %vm449 = vcmp.gt.f32.partialorder %v441, 0.0
  %v450 = vmul.f32 %v434, 0.2
  %v451 = vmul.f32 %v435, 0.2
  %v452 = vmul.f32 %v436, 0.2
  %v453 = vmul.f32 %v437, 0.2
  %v454 = vmul.f32 %v438, 0.2
  %v455 = vmul.f32 %v439, 0.2
  %v456 = vmul.f32 %v440, 0.2
  %v457 = vmul.f32 %v441, 0.2
  %v458 = vsel %vm442, %v434, %v450
  %v459 = vsel %vm443, %v435, %v451
  %v460 = vsel %vm444, %v436, %v452
  %v461 = vsel %vm445, %v437, %v453
  %v462 = vsel %vm446, %v438, %v454
  %v463 = vsel %vm447, %v439, %v455
  %v464 = vsel %vm448, %v440, %v456
  %v465 = vsel %vm449, %v441, %v457
  %466 = vst [vmem:[#allocation2] sm:$0xff] 0.0
  %467 = vst [vmem:[#allocation2 + $0x8] sm:$0xff] 0.0
  %468 = vst [vmem:[#allocation2 + $0x10] sm:$0xff] 0.0
  %469 = vst [vmem:[#allocation2 + $0x18] sm:$0xff] 0.0
  %470 = vst [vmem:[#allocation2 + $0x20] sm:$0xff] 0.0
  %471 = vst [vmem:[#allocation2 + $0x28] sm:$0xff] 0.0
  %472 = vst [vmem:[#allocation2 + $0x30] sm:$0xff] 0.0
  %473 = vst [vmem:[#allocation2 + $0x38] sm:$0xff] 0.0
  %474 = vst [vmem:[#allocation2 + $0x40] sm:$0xff] 0.0
  %475 = vst [vmem:[#allocation2 + $0x48] sm:$0xff] 0.0
  %476 = vst [vmem:[#allocation2 + $0x1] sm:$0xff] %v458
  %477 = vst [vmem:[#allocation2 + $0xb] sm:$0xff] %v459
  %478 = vst [vmem:[#allocation2 + $0x15] sm:$0xff] %v460
  %479 = vst [vmem:[#allocation2 + $0x1f] sm:$0xff] %v461
  %480 = vst [vmem:[#allocation2 + $0x29] sm:$0xff] %v462
  %481 = vst [vmem:[#allocation2 + $0x33] sm:$0xff] %v463
  %482 = vst [vmem:[#allocation2 + $0x3d] sm:$0xff] %v464
  %483 = vst [vmem:[#allocation2 + $0x47] sm:$0xff] %v465
  %v484 = vld [vmem:[#allocation2] ss:$2 sm:$0xf]
  %s485 = scalar_lea.vmem [#allocation2], 10
  %v486 = vld [vmem:[%s485] ss:$2 sm:$0xf]
  %s487 = scalar_lea.vmem [#allocation2], 20
  %v488 = vld [vmem:[%s487] ss:$2 sm:$0xf]
  %s489 = scalar_lea.vmem [#allocation2], 30
  %v490 = vld [vmem:[%s489] ss:$2 sm:$0xf]
  %s491 = scalar_lea.vmem [#allocation2], 40
  %v492 = vld [vmem:[%s491] ss:$2 sm:$0xf]
  %s493 = scalar_lea.vmem [#allocation2], 50
  %v494 = vld [vmem:[%s493] ss:$2 sm:$0xf]
  %s495 = scalar_lea.vmem [#allocation2], 60
  %v496 = vld [vmem:[%s495] ss:$2 sm:$0xf]
  %s497 = scalar_lea.vmem [#allocation2], 70
  %v498 = vld [vmem:[%s497] ss:$2 sm:$0xf]
  %v500 = vrot.slane %v486, 4
  %v503 = vrot.slane %v490, 4
  %v506 = vrot.slane %v494, 4
  %v509 = vrot.slane %v498, 4
  %vm511 = vcmask 1043456
  %v512 = vsel %vm511, %v484, %v500
  %v513 = vsel %vm511, %v488, %v503
  %v514 = vsel %vm511, %v492, %v506
  %v515 = vsel %vm511, %v496, %v509
  %v516 = vpack.c.bf16 %v513, %v512
  %v517 = vpack.c.bf16 %v515, %v514
  %v518 = vld [vmem:[%s3] sm:$0xf]
  %v519 = vld [vmem:[%s3 + $0x4] sm:$0xf]
  %v520 = vld [vmem:[%s3 + $0x8] sm:$0xf]
  %v521 = vld [vmem:[%s3 + $0xc] sm:$0xf]
  %v522 = vld [vmem:[%s3 + $0x10] sm:$0xf]
  %v523 = vld [vmem:[%s3 + $0x14] sm:$0xf]
  %v524 = vld [vmem:[%s3 + $0x18] sm:$0xf]
  %v525 = vld [vmem:[%s3 + $0x1c] sm:$0xf]
  %v526 = vld [vmem:[%s3 + $0x20] sm:$0xf]
  %v527 = vld [vmem:[%s3 + $0x24] sm:$0xf]
  %v528 = vld [vmem:[%s3 + $0x28] sm:$0xf]
  %v529 = vld [vmem:[%s3 + $0x2c] sm:$0xf]
  %v530 = vld [vmem:[%s3 + $0x30] sm:$0xf]
  %v531 = vld [vmem:[%s3 + $0x34] sm:$0xf]
  %v532 = vld [vmem:[%s3 + $0x38] sm:$0xf]
  %v533 = vld [vmem:[%s3 + $0x3c] sm:$0xf]
  %s534 = scalar_lea.vmem [#allocation2], 1
  %v535 = vld [vmem:[%s534] ss:$2 sm:$0xf]
  %s536 = scalar_lea.vmem [#allocation2], 11
  %v537 = vld [vmem:[%s536] ss:$2 sm:$0xf]
  %s538 = scalar_lea.vmem [#allocation2], 21
  %v539 = vld [vmem:[%s538] ss:$2 sm:$0xf]
  %s540 = scalar_lea.vmem [#allocation2], 31
  %v541 = vld [vmem:[%s540] ss:$2 sm:$0xf]
  %s542 = scalar_lea.vmem [#allocation2], 41
  %v543 = vld [vmem:[%s542] ss:$2 sm:$0xf]
  %s544 = scalar_lea.vmem [#allocation2], 51
  %v545 = vld [vmem:[%s544] ss:$2 sm:$0xf]
  %s546 = scalar_lea.vmem [#allocation2], 61
  %v547 = vld [vmem:[%s546] ss:$2 sm:$0xf]
  %s548 = scalar_lea.vmem [#allocation2], 71
  %v549 = vld [vmem:[%s548] ss:$2 sm:$0xf]
  %v551 = vrot.slane %v537, 4
  %v554 = vrot.slane %v541, 4
  %v557 = vrot.slane %v545, 4
  %v560 = vrot.slane %v549, 4
  %v562 = vsel %vm511, %v535, %v551
  %v563 = vsel %vm511, %v539, %v554
  %v564 = vsel %vm511, %v543, %v557
  %v565 = vsel %vm511, %v547, %v560
  %v566 = vpack.c.bf16 %v563, %v562
  %v567 = vpack.c.bf16 %v565, %v564
  %s568 = scalar_lea.vmem %s3, 64
  %v569 = vld [vmem:[%s568] sm:$0xf]
  %v570 = vld [vmem:[%s568 + $0x4] sm:$0xf]
  %v571 = vld [vmem:[%s568 + $0x8] sm:$0xf]
  %v572 = vld [vmem:[%s568 + $0xc] sm:$0xf]
  %v573 = vld [vmem:[%s568 + $0x10] sm:$0xf]
  %v574 = vld [vmem:[%s568 + $0x14] sm:$0xf]
  %v575 = vld [vmem:[%s568 + $0x18] sm:$0xf]
  %v576 = vld [vmem:[%s568 + $0x1c] sm:$0xf]
  %v577 = vld [vmem:[%s568 + $0x20] sm:$0xf]
  %v578 = vld [vmem:[%s568 + $0x24] sm:$0xf]
  %v579 = vld [vmem:[%s568 + $0x28] sm:$0xf]
  %v580 = vld [vmem:[%s568 + $0x2c] sm:$0xf]
  %v581 = vld [vmem:[%s568 + $0x30] sm:$0xf]
  %v582 = vld [vmem:[%s568 + $0x34] sm:$0xf]
  %v583 = vld [vmem:[%s568 + $0x38] sm:$0xf]
  %v584 = vld [vmem:[%s568 + $0x3c] sm:$0xf]
  %v601 = vunpack.c.l.b16 %v569
  %v602 = vunpack.c.l.b16 %v570
  %v603 = vunpack.c.l.b16 %v571
  %v604 = vunpack.c.l.b16 %v572
  %v605 = vunpack.c.l.b16 %v573
  %v606 = vunpack.c.l.b16 %v574
  %v607 = vunpack.c.l.b16 %v575
  %v608 = vunpack.c.l.b16 %v576
  %v609 = vunpack.c.l.b16 %v577
  %v610 = vunpack.c.l.b16 %v578
  %v611 = vunpack.c.l.b16 %v579
  %v612 = vunpack.c.l.b16 %v580
  %v613 = vunpack.c.l.b16 %v581
  %v614 = vunpack.c.l.b16 %v582
  %v615 = vunpack.c.l.b16 %v583
  %v616 = vunpack.c.l.b16 %v584
  %v617 = vpack.c.b16 %v602, %v601
  %v618 = vpack.c.b16 %v604, %v603
  %v619 = vpack.c.b16 %v606, %v605
  %v620 = vpack.c.b16 %v608, %v607
  %v621 = vpack.c.b16 %v610, %v609
  %v622 = vpack.c.b16 %v612, %v611
  %v623 = vpack.c.b16 %v614, %v613
  %v624 = vpack.c.b16 %v616, %v615
  %633 = vmatpush.bf16.msra.mxu0 %v624
  %634 = vmatpush.bf16.msra.mxu0 %v623
  %635 = vmatpush.bf16.msra.mxu0 %v622
  %636 = vmatpush.bf16.msra.mxu0 %v621
  %637 = vmatpush.bf16.msra.mxu0 %v620
  %638 = vmatpush.bf16.msra.mxu0 %v619
  %639 = vmatpush.bf16.msra.mxu0 %v618
  %640 = vmatpush.bf16.msra.mxu0 %v617
  %641 = vmatmul.bf16.gmra.mxu0 %v566
  %v642 = vpop.f32.mrf.mxu0
  %v643 = vadd.f32 0.0, %v642
  %v644 = vpop.f32.mrf.mxu0
  %v645 = vadd.f32 0.0, %v644
  %646 = vmatmul.bf16.gmra.mxu0 %v567
  %v647 = vpop.f32.mrf.mxu0
  %v648 = vadd.f32 0.0, %v647
  %v649 = vpop.f32.mrf.mxu0
  %v650 = vadd.f32 0.0, %v649
  %651 = vdwg.mxu0
  %v668 = vunpack.c.l.b16 %v518
  %v669 = vunpack.c.l.b16 %v519
  %v670 = vunpack.c.l.b16 %v520
  %v671 = vunpack.c.l.b16 %v521
  %v672 = vunpack.c.l.b16 %v522
  %v673 = vunpack.c.l.b16 %v523
  %v674 = vunpack.c.l.b16 %v524
  %v675 = vunpack.c.l.b16 %v525
  %v676 = vunpack.c.l.b16 %v526
  %v677 = vunpack.c.l.b16 %v527
  %v678 = vunpack.c.l.b16 %v528
  %v679 = vunpack.c.l.b16 %v529
  %v680 = vunpack.c.l.b16 %v530
  %v681 = vunpack.c.l.b16 %v531
  %v682 = vunpack.c.l.b16 %v532
  %v683 = vunpack.c.l.b16 %v533
  %v684 = vpack.c.b16 %v669, %v668
  %v685 = vpack.c.b16 %v671, %v670
  %v686 = vpack.c.b16 %v673, %v672
  %v687 = vpack.c.b16 %v675, %v674
  %v688 = vpack.c.b16 %v677, %v676
  %v689 = vpack.c.b16 %v679, %v678
  %v690 = vpack.c.b16 %v681, %v680
  %v691 = vpack.c.b16 %v683, %v682
  %700 = vmatpush.bf16.msra.mxu0 %v691
  %701 = vmatpush.bf16.msra.mxu0 %v690
  %702 = vmatpush.bf16.msra.mxu0 %v689
  %703 = vmatpush.bf16.msra.mxu0 %v688
  %704 = vmatpush.bf16.msra.mxu0 %v687
  %705 = vmatpush.bf16.msra.mxu0 %v686
  %706 = vmatpush.bf16.msra.mxu0 %v685
  %707 = vmatpush.bf16.msra.mxu0 %v684
  %708 = vmatmul.bf16.gmra.mxu0 %v516
  %v709 = vpop.f32.mrf.mxu0
  %v710 = vadd.f32 %v643, %v709
  %v711 = vpop.f32.mrf.mxu0
  %v712 = vadd.f32 %v645, %v711
  %713 = vmatmul.bf16.gmra.mxu0 %v517
  %v714 = vpop.f32.mrf.mxu0
  %v715 = vadd.f32 %v648, %v714
  %v716 = vpop.f32.mrf.mxu0
  %v717 = vadd.f32 %v650, %v716
  %718 = vdwg.mxu0
  %s719 = scalar_lea.vmem [#allocation2], 2
  %v720 = vld [vmem:[%s719] ss:$2 sm:$0xf]
  %s721 = scalar_lea.vmem [#allocation2], 12
  %v722 = vld [vmem:[%s721] ss:$2 sm:$0xf]
  %s723 = scalar_lea.vmem [#allocation2], 22
  %v724 = vld [vmem:[%s723] ss:$2 sm:$0xf]
  %s725 = scalar_lea.vmem [#allocation2], 32
  %v726 = vld [vmem:[%s725] ss:$2 sm:$0xf]
  %s727 = scalar_lea.vmem [#allocation2], 42
  %v728 = vld [vmem:[%s727] ss:$2 sm:$0xf]
  %s729 = scalar_lea.vmem [#allocation2], 52
  %v730 = vld [vmem:[%s729] ss:$2 sm:$0xf]
  %s731 = scalar_lea.vmem [#allocation2], 62
  %v732 = vld [vmem:[%s731] ss:$2 sm:$0xf]
  %s733 = scalar_lea.vmem [#allocation2], 72
  %v734 = vld [vmem:[%s733] ss:$2 sm:$0xf]
  %v736 = vrot.slane %v722, 4
  %v739 = vrot.slane %v726, 4
  %v742 = vrot.slane %v730, 4
  %v745 = vrot.slane %v734, 4
  %v747 = vsel %vm511, %v720, %v736
  %v748 = vsel %vm511, %v724, %v739
  %v749 = vsel %vm511, %v728, %v742
  %v750 = vsel %vm511, %v732, %v745
  %v751 = vpack.c.bf16 %v748, %v747
  %v752 = vpack.c.bf16 %v750, %v749
  %s753 = scalar_lea.vmem %s3, 128
  %v754 = vld [vmem:[%s753] sm:$0xf]
  %v755 = vld [vmem:[%s753 + $0x4] sm:$0xf]
  %v756 = vld [vmem:[%s753 + $0x8] sm:$0xf]
  %v757 = vld [vmem:[%s753 + $0xc] sm:$0xf]
  %v758 = vld [vmem:[%s753 + $0x10] sm:$0xf]
  %v759 = vld [vmem:[%s753 + $0x14] sm:$0xf]
  %v760 = vld [vmem:[%s753 + $0x18] sm:$0xf]
  %v761 = vld [vmem:[%s753 + $0x1c] sm:$0xf]
  %v762 = vld [vmem:[%s753 + $0x20] sm:$0xf]
  %v763 = vld [vmem:[%s753 + $0x24] sm:$0xf]
  %v764 = vld [vmem:[%s753 + $0x28] sm:$0xf]
  %v765 = vld [vmem:[%s753 + $0x2c] sm:$0xf]
  %v766 = vld [vmem:[%s753 + $0x30] sm:$0xf]
  %v767 = vld [vmem:[%s753 + $0x34] sm:$0xf]
  %v768 = vld [vmem:[%s753 + $0x38] sm:$0xf]
  %v769 = vld [vmem:[%s753 + $0x3c] sm:$0xf]
  %v786 = vunpack.c.l.b16 %v754
  %v787 = vunpack.c.l.b16 %v755
  %v788 = vunpack.c.l.b16 %v756
  %v789 = vunpack.c.l.b16 %v757
  %v790 = vunpack.c.l.b16 %v758
  %v791 = vunpack.c.l.b16 %v759
  %v792 = vunpack.c.l.b16 %v760
  %v793 = vunpack.c.l.b16 %v761
  %v794 = vunpack.c.l.b16 %v762
  %v795 = vunpack.c.l.b16 %v763
  %v796 = vunpack.c.l.b16 %v764
  %v797 = vunpack.c.l.b16 %v765
  %v798 = vunpack.c.l.b16 %v766
  %v799 = vunpack.c.l.b16 %v767
  %v800 = vunpack.c.l.b16 %v768
  %v801 = vunpack.c.l.b16 %v769
  %v802 = vpack.c.b16 %v787, %v786
  %v803 = vpack.c.b16 %v789, %v788
  %v804 = vpack.c.b16 %v791, %v790
  %v805 = vpack.c.b16 %v793, %v792
  %v806 = vpack.c.b16 %v795, %v794
  %v807 = vpack.c.b16 %v797, %v796
  %v808 = vpack.c.b16 %v799, %v798
  %v809 = vpack.c.b16 %v801, %v800
  %818 = vmatpush.bf16.msra.mxu0 %v809
  %819 = vmatpush.bf16.msra.mxu0 %v808
  %820 = vmatpush.bf16.msra.mxu0 %v807
  %821 = vmatpush.bf16.msra.mxu0 %v806
  %822 = vmatpush.bf16.msra.mxu0 %v805
  %823 = vmatpush.bf16.msra.mxu0 %v804
  %824 = vmatpush.bf16.msra.mxu0 %v803
  %825 = vmatpush.bf16.msra.mxu0 %v802
  %826 = vmatmul.bf16.gmra.mxu0 %v751
  %v827 = vpop.f32.mrf.mxu0
  %v828 = vadd.f32 0.0, %v827
  %v829 = vpop.f32.mrf.mxu0
  %v830 = vadd.f32 0.0, %v829
  %831 = vmatmul.bf16.gmra.mxu0 %v752
  %v832 = vpop.f32.mrf.mxu0
  %v833 = vadd.f32 0.0, %v832
  %v834 = vpop.f32.mrf.mxu0
  %v835 = vadd.f32 0.0, %v834
  %836 = vdwg.mxu0
  %v837 = vadd.f32 %v710, %v828
  %v838 = vadd.f32 %v712, %v830
  %v839 = vadd.f32 %v715, %v833
  %v840 = vadd.f32 %v717, %v835
  %s841 = scalar_lea.vmem [#allocation2], 3
  %v842 = vld [vmem:[%s841] ss:$2 sm:$0xf]
  %s843 = scalar_lea.vmem [#allocation2], 13
  %v844 = vld [vmem:[%s843] ss:$2 sm:$0xf]
  %s845 = scalar_lea.vmem [#allocation2], 23
  %v846 = vld [vmem:[%s845] ss:$2 sm:$0xf]
  %s847 = scalar_lea.vmem [#allocation2], 33
  %v848 = vld [vmem:[%s847] ss:$2 sm:$0xf]
  %s849 = scalar_lea.vmem [#allocation2], 43
  %v850 = vld [vmem:[%s849] ss:$2 sm:$0xf]
  %s851 = scalar_lea.vmem [#allocation2], 53
  %v852 = vld [vmem:[%s851] ss:$2 sm:$0xf]
  %s853 = scalar_lea.vmem [#allocation2], 63
  %v854 = vld [vmem:[%s853] ss:$2 sm:$0xf]
  %s855 = scalar_lea.vmem [#allocation2], 73
  %v856 = vld [vmem:[%s855] ss:$2 sm:$0xf]
  %v858 = vrot.slane %v844, 4
  %v861 = vrot.slane %v848, 4
  %v864 = vrot.slane %v852, 4
  %v867 = vrot.slane %v856, 4
  %v869 = vsel %vm511, %v842, %v858
  %v870 = vsel %vm511, %v846, %v861
  %v871 = vsel %vm511, %v850, %v864
  %v872 = vsel %vm511, %v854, %v867
  %v873 = vpack.c.bf16 %v870, %v869
  %v874 = vpack.c.bf16 %v872, %v871
  %s875 = scalar_lea.vmem %s3, 192
  %v876 = vld [vmem:[%s875] sm:$0xf]
  %v877 = vld [vmem:[%s875 + $0x4] sm:$0xf]
  %v878 = vld [vmem:[%s875 + $0x8] sm:$0xf]
  %v879 = vld [vmem:[%s875 + $0xc] sm:$0xf]
  %v880 = vld [vmem:[%s875 + $0x10] sm:$0xf]
  %v881 = vld [vmem:[%s875 + $0x14] sm:$0xf]
  %v882 = vld [vmem:[%s875 + $0x18] sm:$0xf]
  %v883 = vld [vmem:[%s875 + $0x1c] sm:$0xf]
  %v884 = vld [vmem:[%s875 + $0x20] sm:$0xf]
  %v885 = vld [vmem:[%s875 + $0x24] sm:$0xf]
  %v886 = vld [vmem:[%s875 + $0x28] sm:$0xf]
  %v887 = vld [vmem:[%s875 + $0x2c] sm:$0xf]
  %v888 = vld [vmem:[%s875 + $0x30] sm:$0xf]
  %v889 = vld [vmem:[%s875 + $0x34] sm:$0xf]
  %v890 = vld [vmem:[%s875 + $0x38] sm:$0xf]
  %v891 = vld [vmem:[%s875 + $0x3c] sm:$0xf]
  %v908 = vunpack.c.l.b16 %v876
  %v909 = vunpack.c.l.b16 %v877
  %v910 = vunpack.c.l.b16 %v878
  %v911 = vunpack.c.l.b16 %v879
  %v912 = vunpack.c.l.b16 %v880
  %v913 = vunpack.c.l.b16 %v881
  %v914 = vunpack.c.l.b16 %v882
  %v915 = vunpack.c.l.b16 %v883
  %v916 = vunpack.c.l.b16 %v884
  %v917 = vunpack.c.l.b16 %v885
  %v918 = vunpack.c.l.b16 %v886
  %v919 = vunpack.c.l.b16 %v887
  %v920 = vunpack.c.l.b16 %v888
  %v921 = vunpack.c.l.b16 %v889
  %v922 = vunpack.c.l.b16 %v890
  %v923 = vunpack.c.l.b16 %v891
  %v924 = vpack.c.b16 %v909, %v908
  %v925 = vpack.c.b16 %v911, %v910
  %v926 = vpack.c.b16 %v913, %v912
  %v927 = vpack.c.b16 %v915, %v914
  %v928 = vpack.c.b16 %v917, %v916
  %v929 = vpack.c.b16 %v919, %v918
  %v930 = vpack.c.b16 %v921, %v920
  %v931 = vpack.c.b16 %v923, %v922
  %940 = vmatpush.bf16.msra.mxu0 %v931
  %941 = vmatpush.bf16.msra.mxu0 %v930
  %942 = vmatpush.bf16.msra.mxu0 %v929
  %943 = vmatpush.bf16.msra.mxu0 %v928
  %944 = vmatpush.bf16.msra.mxu0 %v927
  %945 = vmatpush.bf16.msra.mxu0 %v926
  %946 = vmatpush.bf16.msra.mxu0 %v925
  %947 = vmatpush.bf16.msra.mxu0 %v924
  %948 = vmatmul.bf16.gmra.mxu0 %v873
  %v949 = vpop.f32.mrf.mxu0
  %v950 = vadd.f32 0.0, %v949
  %v951 = vpop.f32.mrf.mxu0
  %v952 = vadd.f32 0.0, %v951
  %953 = vmatmul.bf16.gmra.mxu0 %v874
  %v954 = vpop.f32.mrf.mxu0
  %v955 = vadd.f32 0.0, %v954
  %v956 = vpop.f32.mrf.mxu0
  %v957 = vadd.f32 0.0, %v956
  %958 = vdwg.mxu0
  %v959 = vadd.f32 %v837, %v950
  %v960 = vadd.f32 %v838, %v952
  %v961 = vadd.f32 %v839, %v955
  %v962 = vadd.f32 %v840, %v957
  %v963 = vld [vmem:[%s4] sm:$0x1]
  %v965 = vperm.slane %v963, 0
  %v967 = vadd.f32 %v959, %v965
  %v968 = vadd.f32 %v960, %v965
  %v969 = vadd.f32 %v961, %v965
  %v970 = vadd.f32 %v962, %v965
  %vm971 = vcmp.gt.f32.partialorder %v967, 0.0
  %vm972 = vcmp.gt.f32.partialorder %v968, 0.0
  %vm973 = vcmp.gt.f32.partialorder %v969, 0.0
  %vm974 = vcmp.gt.f32.partialorder %v970, 0.0
  %v975 = vmul.f32 %v967, 0.2
  %v976 = vmul.f32 %v968, 0.2
  %v977 = vmul.f32 %v969, 0.2
  %v978 = vmul.f32 %v970, 0.2
  %v979 = vsel %vm971, %v967, %v975
  %v980 = vsel %vm972, %v968, %v976
  %v981 = vsel %vm973, %v969, %v977
  %v982 = vsel %vm974, %v970, %v978
  %983 = vst [vmem:[#allocation3] sm:$0xff] 0.0
  %984 = vst [vmem:[#allocation3 + $0x8] sm:$0xff] 0.0
  %985 = vst [vmem:[#allocation3 + $0x10] sm:$0xff] 0.0
  %986 = vst [vmem:[#allocation3 + $0x18] sm:$0xff] 0.0
  %987 = vst [vmem:[#allocation3 + $0x20] sm:$0xff] 0.0
  %988 = vst [vmem:[#allocation3 + $0x28] sm:$0xff] 0.0
  %989 = vst [vmem:[#allocation3 + $0x1] sm:$0xf] %v979
  %990 = vst [vmem:[#allocation3 + $0x3] sm:$0xf0] %v979
  %991 = vst [vmem:[#allocation3 + $0xd] sm:$0xf] %v980
  %992 = vst [vmem:[#allocation3 + $0xf] sm:$0xf0] %v980
  %993 = vst [vmem:[#allocation3 + $0x19] sm:$0xf] %v981
  %994 = vst [vmem:[#allocation3 + $0x1b] sm:$0xf0] %v981
  %995 = vst [vmem:[#allocation3 + $0x25] sm:$0xf] %v982
  %996 = vst [vmem:[#allocation3 + $0x27] sm:$0xf0] %v982
  %v997 = vld [vmem:[#allocation3] ss:$2 sm:$0x3]
  %s998 = scalar_lea.vmem [#allocation3], 6
  %v999 = vld [vmem:[%s998] ss:$2 sm:$0x3]
  %s1000 = scalar_lea.vmem [#allocation3], 12
  %v1001 = vld [vmem:[%s1000] ss:$2 sm:$0x3]
  %s1002 = scalar_lea.vmem [#allocation3], 18
  %v1003 = vld [vmem:[%s1002] ss:$2 sm:$0x3]
  %s1004 = scalar_lea.vmem [#allocation3], 24
  %v1005 = vld [vmem:[%s1004] ss:$2 sm:$0x3]
  %s1006 = scalar_lea.vmem [#allocation3], 30
  %v1007 = vld [vmem:[%s1006] ss:$2 sm:$0x3]
  %s1008 = scalar_lea.vmem [#allocation3], 36
  %v1009 = vld [vmem:[%s1008] ss:$2 sm:$0x3]
  %s1010 = scalar_lea.vmem [#allocation3], 42
  %v1011 = vld [vmem:[%s1010] ss:$2 sm:$0x3]
  %v1013 = vrot.slane %v999, 6
  %v1016 = vrot.slane %v1001, 4
  %v1019 = vrot.slane %v1003, 2
  %v1022 = vrot.slane %v1007, 6
  %v1025 = vrot.slane %v1009, 4
  %v1028 = vrot.slane %v1011, 2
  %vm1030 = vcmask 1041408
  %v1031 = vsel %vm1030, %v997, %v1013
  %v1032 = vsel %vm511, %v1031, %v1016
  %vm1033 = vcmask 1045504
  %v1034 = vsel %vm1033, %v1032, %v1019
  %v1035 = vsel %vm1030, %v1005, %v1022
  %v1036 = vsel %vm511, %v1035, %v1025
  %v1037 = vsel %vm1033, %v1036, %v1028
  %v1038 = vpack.c.bf16 %v1037, %v1034
  %v1039 = vld [vmem:[%s5] sm:$0xf]
  %v1040 = vld [vmem:[%s5 + $0x4] sm:$0xf]
  %v1041 = vld [vmem:[%s5 + $0x8] sm:$0xf]
  %v1042 = vld [vmem:[%s5 + $0xc] sm:$0xf]
  %v1043 = vld [vmem:[%s5 + $0x10] sm:$0xf]
  %v1044 = vld [vmem:[%s5 + $0x14] sm:$0xf]
  %v1045 = vld [vmem:[%s5 + $0x18] sm:$0xf]
  %v1046 = vld [vmem:[%s5 + $0x1c] sm:$0xf]
  %v1047 = vld [vmem:[%s5 + $0x20] sm:$0xf]
  %v1048 = vld [vmem:[%s5 + $0x24] sm:$0xf]
  %v1049 = vld [vmem:[%s5 + $0x28] sm:$0xf]
  %v1050 = vld [vmem:[%s5 + $0x2c] sm:$0xf]
  %v1051 = vld [vmem:[%s5 + $0x30] sm:$0xf]
  %v1052 = vld [vmem:[%s5 + $0x34] sm:$0xf]
  %v1053 = vld [vmem:[%s5 + $0x38] sm:$0xf]
  %v1054 = vld [vmem:[%s5 + $0x3c] sm:$0xf]
  %s1055 = scalar_lea.vmem [#allocation3], 1
  %v1056 = vld [vmem:[%s1055] ss:$2 sm:$0x3]
  %s1057 = scalar_lea.vmem [#allocation3], 7
  %v1058 = vld [vmem:[%s1057] ss:$2 sm:$0x3]
  %s1059 = scalar_lea.vmem [#allocation3], 13
  %v1060 = vld [vmem:[%s1059] ss:$2 sm:$0x3]
  %s1061 = scalar_lea.vmem [#allocation3], 19
  %v1062 = vld [vmem:[%s1061] ss:$2 sm:$0x3]
  %s1063 = scalar_lea.vmem [#allocation3], 25
  %v1064 = vld [vmem:[%s1063] ss:$2 sm:$0x3]
  %s1065 = scalar_lea.vmem [#allocation3], 31
  %v1066 = vld [vmem:[%s1065] ss:$2 sm:$0x3]
  %s1067 = scalar_lea.vmem [#allocation3], 37
  %v1068 = vld [vmem:[%s1067] ss:$2 sm:$0x3]
  %s1069 = scalar_lea.vmem [#allocation3], 43
  %v1070 = vld [vmem:[%s1069] ss:$2 sm:$0x3]
  %v1072 = vrot.slane %v1058, 6
  %v1075 = vrot.slane %v1060, 4
  %v1078 = vrot.slane %v1062, 2
  %v1081 = vrot.slane %v1066, 6
  %v1084 = vrot.slane %v1068, 4
  %v1087 = vrot.slane %v1070, 2
  %v1089 = vsel %vm1030, %v1056, %v1072
  %v1090 = vsel %vm511, %v1089, %v1075
  %v1091 = vsel %vm1033, %v1090, %v1078
  %v1092 = vsel %vm1030, %v1064, %v1081
  %v1093 = vsel %vm511, %v1092, %v1084
  %v1094 = vsel %vm1033, %v1093, %v1087
  %v1095 = vpack.c.bf16 %v1094, %v1091
  %s1096 = scalar_lea.vmem %s5, 64
  %v1097 = vld [vmem:[%s1096] sm:$0xf]
  %v1098 = vld [vmem:[%s1096 + $0x4] sm:$0xf]
  %v1099 = vld [vmem:[%s1096 + $0x8] sm:$0xf]
  %v1100 = vld [vmem:[%s1096 + $0xc] sm:$0xf]
  %v1101 = vld [vmem:[%s1096 + $0x10] sm:$0xf]
  %v1102 = vld [vmem:[%s1096 + $0x14] sm:$0xf]
  %v1103 = vld [vmem:[%s1096 + $0x18] sm:$0xf]
  %v1104 = vld [vmem:[%s1096 + $0x1c] sm:$0xf]
  %v1105 = vld [vmem:[%s1096 + $0x20] sm:$0xf]
  %v1106 = vld [vmem:[%s1096 + $0x24] sm:$0xf]
  %v1107 = vld [vmem:[%s1096 + $0x28] sm:$0xf]
  %v1108 = vld [vmem:[%s1096 + $0x2c] sm:$0xf]
  %v1109 = vld [vmem:[%s1096 + $0x30] sm:$0xf]
  %v1110 = vld [vmem:[%s1096 + $0x34] sm:$0xf]
  %v1111 = vld [vmem:[%s1096 + $0x38] sm:$0xf]
  %v1112 = vld [vmem:[%s1096 + $0x3c] sm:$0xf]
  %v1129 = vunpack.c.l.b16 %v1097
  %v1130 = vunpack.c.l.b16 %v1098
  %v1131 = vunpack.c.l.b16 %v1099
  %v1132 = vunpack.c.l.b16 %v1100
  %v1133 = vunpack.c.l.b16 %v1101
  %v1134 = vunpack.c.l.b16 %v1102
  %v1135 = vunpack.c.l.b16 %v1103
  %v1136 = vunpack.c.l.b16 %v1104
  %v1137 = vunpack.c.l.b16 %v1105
  %v1138 = vunpack.c.l.b16 %v1106
  %v1139 = vunpack.c.l.b16 %v1107
  %v1140 = vunpack.c.l.b16 %v1108
  %v1141 = vunpack.c.l.b16 %v1109
  %v1142 = vunpack.c.l.b16 %v1110
  %v1143 = vunpack.c.l.b16 %v1111
  %v1144 = vunpack.c.l.b16 %v1112
  %v1145 = vpack.c.b16 %v1130, %v1129
  %v1146 = vpack.c.b16 %v1132, %v1131
  %v1147 = vpack.c.b16 %v1134, %v1133
  %v1148 = vpack.c.b16 %v1136, %v1135
  %v1149 = vpack.c.b16 %v1138, %v1137
  %v1150 = vpack.c.b16 %v1140, %v1139
  %v1151 = vpack.c.b16 %v1142, %v1141
  %v1152 = vpack.c.b16 %v1144, %v1143
  %1161 = vmatpush.bf16.msra.mxu0 %v1152
  %1162 = vmatpush.bf16.msra.mxu0 %v1151
  %1163 = vmatpush.bf16.msra.mxu0 %v1150
  %1164 = vmatpush.bf16.msra.mxu0 %v1149
  %1165 = vmatpush.bf16.msra.mxu0 %v1148
  %1166 = vmatpush.bf16.msra.mxu0 %v1147
  %1167 = vmatpush.bf16.msra.mxu0 %v1146
  %1168 = vmatpush.bf16.msra.mxu0 %v1145
  %1169 = vmatmul.bf16.gmra.mxu0 %v1095
  %v1170 = vpop.f32.mrf.mxu0
  %v1171 = vadd.f32 0.0, %v1170
  %v1172 = vpop.f32.mrf.mxu0
  %v1173 = vadd.f32 0.0, %v1172
  %1174 = vdwg.mxu0
  %v1191 = vunpack.c.l.b16 %v1039
  %v1192 = vunpack.c.l.b16 %v1040
  %v1193 = vunpack.c.l.b16 %v1041
  %v1194 = vunpack.c.l.b16 %v1042
  %v1195 = vunpack.c.l.b16 %v1043
  %v1196 = vunpack.c.l.b16 %v1044
  %v1197 = vunpack.c.l.b16 %v1045
  %v1198 = vunpack.c.l.b16 %v1046
  %v1199 = vunpack.c.l.b16 %v1047
  %v1200 = vunpack.c.l.b16 %v1048
  %v1201 = vunpack.c.l.b16 %v1049
  %v1202 = vunpack.c.l.b16 %v1050
  %v1203 = vunpack.c.l.b16 %v1051
  %v1204 = vunpack.c.l.b16 %v1052
  %v1205 = vunpack.c.l.b16 %v1053
  %v1206 = vunpack.c.l.b16 %v1054
  %v1207 = vpack.c.b16 %v1192, %v1191
  %v1208 = vpack.c.b16 %v1194, %v1193
  %v1209 = vpack.c.b16 %v1196, %v1195
  %v1210 = vpack.c.b16 %v1198, %v1197
  %v1211 = vpack.c.b16 %v1200, %v1199
  %v1212 = vpack.c.b16 %v1202, %v1201
  %v1213 = vpack.c.b16 %v1204, %v1203
  %v1214 = vpack.c.b16 %v1206, %v1205
  %1223 = vmatpush.bf16.msra.mxu0 %v1214
  %1224 = vmatpush.bf16.msra.mxu0 %v1213
  %1225 = vmatpush.bf16.msra.mxu0 %v1212
  %1226 = vmatpush.bf16.msra.mxu0 %v1211
  %1227 = vmatpush.bf16.msra.mxu0 %v1210
  %1228 = vmatpush.bf16.msra.mxu0 %v1209
  %1229 = vmatpush.bf16.msra.mxu0 %v1208
  %1230 = vmatpush.bf16.msra.mxu0 %v1207
  %1231 = vmatmul.bf16.gmra.mxu0 %v1038
  %v1232 = vpop.f32.mrf.mxu0
  %v1233 = vadd.f32 %v1171, %v1232
  %v1234 = vpop.f32.mrf.mxu0
  %v1235 = vadd.f32 %v1173, %v1234
  %1236 = vdwg.mxu0
  %s1237 = scalar_lea.vmem [#allocation3], 2
  %v1238 = vld [vmem:[%s1237] ss:$2 sm:$0x3]
  %s1239 = scalar_lea.vmem [#allocation3], 8
  %v1240 = vld [vmem:[%s1239] ss:$2 sm:$0x3]
  %s1241 = scalar_lea.vmem [#allocation3], 14
  %v1242 = vld [vmem:[%s1241] ss:$2 sm:$0x3]
  %s1243 = scalar_lea.vmem [#allocation3], 20
  %v1244 = vld [vmem:[%s1243] ss:$2 sm:$0x3]
  %s1245 = scalar_lea.vmem [#allocation3], 26
  %v1246 = vld [vmem:[%s1245] ss:$2 sm:$0x3]
  %s1247 = scalar_lea.vmem [#allocation3], 32
  %v1248 = vld [vmem:[%s1247] ss:$2 sm:$0x3]
  %s1249 = scalar_lea.vmem [#allocation3], 38
  %v1250 = vld [vmem:[%s1249] ss:$2 sm:$0x3]
  %s1251 = scalar_lea.vmem [#allocation3], 44
  %v1252 = vld [vmem:[%s1251] ss:$2 sm:$0x3]
  %v1254 = vrot.slane %v1240, 6
  %v1257 = vrot.slane %v1242, 4
  %v1260 = vrot.slane %v1244, 2
  %v1263 = vrot.slane %v1248, 6
  %v1266 = vrot.slane %v1250, 4
  %v1269 = vrot.slane %v1252, 2
  %v1271 = vsel %vm1030, %v1238, %v1254
  %v1272 = vsel %vm511, %v1271, %v1257
  %v1273 = vsel %vm1033, %v1272, %v1260
  %v1274 = vsel %vm1030, %v1246, %v1263
  %v1275 = vsel %vm511, %v1274, %v1266
  %v1276 = vsel %vm1033, %v1275, %v1269
  %v1277 = vpack.c.bf16 %v1276, %v1273
  %s1278 = scalar_lea.vmem %s5, 128
  %v1279 = vld [vmem:[%s1278] sm:$0xf]
  %v1280 = vld [vmem:[%s1278 + $0x4] sm:$0xf]
  %v1281 = vld [vmem:[%s1278 + $0x8] sm:$0xf]
  %v1282 = vld [vmem:[%s1278 + $0xc] sm:$0xf]
  %v1283 = vld [vmem:[%s1278 + $0x10] sm:$0xf]
  %v1284 = vld [vmem:[%s1278 + $0x14] sm:$0xf]
  %v1285 = vld [vmem:[%s1278 + $0x18] sm:$0xf]
  %v1286 = vld [vmem:[%s1278 + $0x1c] sm:$0xf]
  %v1287 = vld [vmem:[%s1278 + $0x20] sm:$0xf]
  %v1288 = vld [vmem:[%s1278 + $0x24] sm:$0xf]
  %v1289 = vld [vmem:[%s1278 + $0x28] sm:$0xf]
  %v1290 = vld [vmem:[%s1278 + $0x2c] sm:$0xf]
  %v1291 = vld [vmem:[%s1278 + $0x30] sm:$0xf]
  %v1292 = vld [vmem:[%s1278 + $0x34] sm:$0xf]
  %v1293 = vld [vmem:[%s1278 + $0x38] sm:$0xf]
  %v1294 = vld [vmem:[%s1278 + $0x3c] sm:$0xf]
  %v1311 = vunpack.c.l.b16 %v1279
  %v1312 = vunpack.c.l.b16 %v1280
  %v1313 = vunpack.c.l.b16 %v1281
  %v1314 = vunpack.c.l.b16 %v1282
  %v1315 = vunpack.c.l.b16 %v1283
  %v1316 = vunpack.c.l.b16 %v1284
  %v1317 = vunpack.c.l.b16 %v1285
  %v1318 = vunpack.c.l.b16 %v1286
  %v1319 = vunpack.c.l.b16 %v1287
  %v1320 = vunpack.c.l.b16 %v1288
  %v1321 = vunpack.c.l.b16 %v1289
  %v1322 = vunpack.c.l.b16 %v1290
  %v1323 = vunpack.c.l.b16 %v1291
  %v1324 = vunpack.c.l.b16 %v1292
  %v1325 = vunpack.c.l.b16 %v1293
  %v1326 = vunpack.c.l.b16 %v1294
  %v1327 = vpack.c.b16 %v1312, %v1311
  %v1328 = vpack.c.b16 %v1314, %v1313
  %v1329 = vpack.c.b16 %v1316, %v1315
  %v1330 = vpack.c.b16 %v1318, %v1317
  %v1331 = vpack.c.b16 %v1320, %v1319
  %v1332 = vpack.c.b16 %v1322, %v1321
  %v1333 = vpack.c.b16 %v1324, %v1323
  %v1334 = vpack.c.b16 %v1326, %v1325
  %1343 = vmatpush.bf16.msra.mxu0 %v1334
  %1344 = vmatpush.bf16.msra.mxu0 %v1333
  %1345 = vmatpush.bf16.msra.mxu0 %v1332
  %1346 = vmatpush.bf16.msra.mxu0 %v1331
  %1347 = vmatpush.bf16.msra.mxu0 %v1330
  %1348 = vmatpush.bf16.msra.mxu0 %v1329
  %1349 = vmatpush.bf16.msra.mxu0 %v1328
  %1350 = vmatpush.bf16.msra.mxu0 %v1327
  %1351 = vmatmul.bf16.gmra.mxu0 %v1277
  %v1352 = vpop.f32.mrf.mxu0
  %v1353 = vadd.f32 0.0, %v1352
  %v1354 = vpop.f32.mrf.mxu0
  %v1355 = vadd.f32 0.0, %v1354
  %1356 = vdwg.mxu0
  %v1357 = vadd.f32 %v1233, %v1353
  %v1358 = vadd.f32 %v1235, %v1355
  %s1359 = scalar_lea.vmem [#allocation3], 3
  %v1360 = vld [vmem:[%s1359] ss:$2 sm:$0x3]
  %s1361 = scalar_lea.vmem [#allocation3], 9
  %v1362 = vld [vmem:[%s1361] ss:$2 sm:$0x3]
  %s1363 = scalar_lea.vmem [#allocation3], 15
  %v1364 = vld [vmem:[%s1363] ss:$2 sm:$0x3]
  %s1365 = scalar_lea.vmem [#allocation3], 21
  %v1366 = vld [vmem:[%s1365] ss:$2 sm:$0x3]
  %s1367 = scalar_lea.vmem [#allocation3], 27
  %v1368 = vld [vmem:[%s1367] ss:$2 sm:$0x3]
  %s1369 = scalar_lea.vmem [#allocation3], 33
  %v1370 = vld [vmem:[%s1369] ss:$2 sm:$0x3]
  %s1371 = scalar_lea.vmem [#allocation3], 39
  %v1372 = vld [vmem:[%s1371] ss:$2 sm:$0x3]
  %s1373 = scalar_lea.vmem [#allocation3], 45
  %v1374 = vld [vmem:[%s1373] ss:$2 sm:$0x3]
  %v1376 = vrot.slane %v1362, 6
  %v1379 = vrot.slane %v1364, 4
  %v1382 = vrot.slane %v1366, 2
  %v1385 = vrot.slane %v1370, 6
  %v1388 = vrot.slane %v1372, 4
  %v1391 = vrot.slane %v1374, 2
  %v1393 = vsel %vm1030, %v1360, %v1376
  %v1394 = vsel %vm511, %v1393, %v1379
  %v1395 = vsel %vm1033, %v1394, %v1382
  %v1396 = vsel %vm1030, %v1368, %v1385
  %v1397 = vsel %vm511, %v1396, %v1388
  %v1398 = vsel %vm1033, %v1397, %v1391
  %v1399 = vpack.c.bf16 %v1398, %v1395
  %s1400 = scalar_lea.vmem %s5, 192
  %v1401 = vld [vmem:[%s1400] sm:$0xf]
  %v1402 = vld [vmem:[%s1400 + $0x4] sm:$0xf]
  %v1403 = vld [vmem:[%s1400 + $0x8] sm:$0xf]
  %v1404 = vld [vmem:[%s1400 + $0xc] sm:$0xf]
  %v1405 = vld [vmem:[%s1400 + $0x10] sm:$0xf]
  %v1406 = vld [vmem:[%s1400 + $0x14] sm:$0xf]
  %v1407 = vld [vmem:[%s1400 + $0x18] sm:$0xf]
  %v1408 = vld [vmem:[%s1400 + $0x1c] sm:$0xf]
  %v1409 = vld [vmem:[%s1400 + $0x20] sm:$0xf]
  %v1410 = vld [vmem:[%s1400 + $0x24] sm:$0xf]
  %v1411 = vld [vmem:[%s1400 + $0x28] sm:$0xf]
  %v1412 = vld [vmem:[%s1400 + $0x2c] sm:$0xf]
  %v1413 = vld [vmem:[%s1400 + $0x30] sm:$0xf]
  %v1414 = vld [vmem:[%s1400 + $0x34] sm:$0xf]
  %v1415 = vld [vmem:[%s1400 + $0x38] sm:$0xf]
  %v1416 = vld [vmem:[%s1400 + $0x3c] sm:$0xf]
  %v1433 = vunpack.c.l.b16 %v1401
  %v1434 = vunpack.c.l.b16 %v1402
  %v1435 = vunpack.c.l.b16 %v1403
  %v1436 = vunpack.c.l.b16 %v1404
  %v1437 = vunpack.c.l.b16 %v1405
  %v1438 = vunpack.c.l.b16 %v1406
  %v1439 = vunpack.c.l.b16 %v1407
  %v1440 = vunpack.c.l.b16 %v1408
  %v1441 = vunpack.c.l.b16 %v1409
  %v1442 = vunpack.c.l.b16 %v1410
  %v1443 = vunpack.c.l.b16 %v1411
  %v1444 = vunpack.c.l.b16 %v1412
  %v1445 = vunpack.c.l.b16 %v1413
  %v1446 = vunpack.c.l.b16 %v1414
  %v1447 = vunpack.c.l.b16 %v1415
  %v1448 = vunpack.c.l.b16 %v1416
  %v1449 = vpack.c.b16 %v1434, %v1433
  %v1450 = vpack.c.b16 %v1436, %v1435
  %v1451 = vpack.c.b16 %v1438, %v1437
  %v1452 = vpack.c.b16 %v1440, %v1439
  %v1453 = vpack.c.b16 %v1442, %v1441
  %v1454 = vpack.c.b16 %v1444, %v1443
  %v1455 = vpack.c.b16 %v1446, %v1445
  %v1456 = vpack.c.b16 %v1448, %v1447
  %1465 = vmatpush.bf16.msra.mxu0 %v1456
  %1466 = vmatpush.bf16.msra.mxu0 %v1455
  %1467 = vmatpush.bf16.msra.mxu0 %v1454
  %1468 = vmatpush.bf16.msra.mxu0 %v1453
  %1469 = vmatpush.bf16.msra.mxu0 %v1452
  %1470 = vmatpush.bf16.msra.mxu0 %v1451
  %1471 = vmatpush.bf16.msra.mxu0 %v1450
  %1472 = vmatpush.bf16.msra.mxu0 %v1449
  %1473 = vmatmul.bf16.gmra.mxu0 %v1399
  %v1474 = vpop.f32.mrf.mxu0
  %v1475 = vadd.f32 0.0, %v1474
  %v1476 = vpop.f32.mrf.mxu0
  %v1477 = vadd.f32 0.0, %v1476
  %1478 = vdwg.mxu0
  %v1479 = vadd.f32 %v1357, %v1475
  %v1480 = vadd.f32 %v1358, %v1477
  %v1481 = vld [vmem:[%s6] sm:$0x1]
  %v1483 = vperm.slane %v1481, 0
  %v1485 = vadd.f32 %v1479, %v1483
  %v1486 = vadd.f32 %v1480, %v1483
  %vm1487 = vcmp.gt.f32.partialorder %v1485, 0.0
  %vm1488 = vcmp.gt.f32.partialorder %v1486, 0.0
  %v1489 = vmul.f32 %v1485, 0.2
  %v1490 = vmul.f32 %v1486, 0.2
  %v1491 = vsel %vm1487, %v1485, %v1489
  %v1492 = vsel %vm1488, %v1486, %v1490
  %v1493 = vld [vmem:[%s7] sm:$0x3]
  %v1494 = vmul.f32 %v1491, %v1493
  %v1495 = vsel %vm1030, %v1494, 0.0
  %1496 = vadd.xlane.f32.xlu0 %v1495
  %v1497 = vpop.xlane.xlu0 %1496
  %v1498 = vsel %vm1030, %v1497, 0.0
  %v1499 = vrot.slane %v1498, 4
  %v1500 = vadd.f32 %v1498, %v1499
  %v1501 = vrot.slane %v1500, 2
  %v1502 = vadd.f32 %v1500, %v1501
  %v1503 = vrot.slane %v1502, 1
  %v1504 = vadd.f32 %v1502, %v1503
  %v1505 = vld [vmem:[#allocation4] sm:$0x1]
  %v1506 = vadd.f32 %v1504, %v1505
  %v1508 = vrot.slane %v1493, 6
  %v1510 = vmul.f32 %v1491, %v1508
  %vm1511 = vcmask 1043458
  %v1512 = vsel %vm1511, %v1510, 0.0
  %1513 = vadd.xlane.f32.xlu0 %v1512
  %v1514 = vpop.xlane.xlu0 %1513
  %v1516 = vrot.slane %v1514, 2
  %v1518 = vsel %vm1030, %v1516, 0.0
  %v1519 = vrot.slane %v1518, 4
  %v1520 = vadd.f32 %v1518, %v1519
  %v1521 = vrot.slane %v1520, 2
  %v1522 = vadd.f32 %v1520, %v1521
  %v1523 = vrot.slane %v1522, 1
  %v1524 = vadd.f32 %v1522, %v1523
  %v1525 = vadd.f32 %v1524, %v1505
  %v1526 = vrot.slane %v1493, 4
  %v1528 = vmul.f32 %v1491, %v1526
  %vm1529 = vcmask 1045508
  %v1530 = vsel %vm1529, %v1528, 0.0
  %1531 = vadd.xlane.f32.xlu0 %v1530
  %v1532 = vpop.xlane.xlu0 %1531
  %v1534 = vrot.slane %v1532, 4
  %v1536 = vsel %vm1030, %v1534, 0.0
  %v1537 = vrot.slane %v1536, 4
  %v1538 = vadd.f32 %v1536, %v1537
  %v1539 = vrot.slane %v1538, 2
  %v1540 = vadd.f32 %v1538, %v1539
  %v1541 = vrot.slane %v1540, 1
  %v1542 = vadd.f32 %v1540, %v1541
  %v1543 = vadd.f32 %v1542, %v1505
  %v1544 = vrot.slane %v1493, 2
  %v1546 = vmul.f32 %v1491, %v1544
  %vm1547 = vcmask 1047558
  %v1548 = vsel %vm1547, %v1546, 0.0
  %1549 = vadd.xlane.f32.xlu0 %v1548
  %v1550 = vpop.xlane.xlu0 %1549
  %v1552 = vrot.slane %v1550, 6
  %v1554 = vsel %vm1030, %v1552, 0.0
  %v1555 = vrot.slane %v1554, 4
  %v1556 = vadd.f32 %v1554, %v1555
  %v1557 = vrot.slane %v1556, 2
  %v1558 = vadd.f32 %v1556, %v1557
  %v1559 = vrot.slane %v1558, 1
  %v1560 = vadd.f32 %v1558, %v1559
  %v1561 = vadd.f32 %v1560, %v1505
  %v1562 = vmul.f32 %v1492, %v1493
  %v1563 = vsel %vm1030, %v1562, 0.0
  %1564 = vadd.xlane.f32.xlu0 %v1563
  %v1565 = vpop.xlane.xlu0 %1564
  %v1566 = vsel %vm1030, %v1565, 0.0
  %v1567 = vrot.slane %v1566, 4
  %v1568 = vadd.f32 %v1566, %v1567
  %v1569 = vrot.slane %v1568, 2
  %v1570 = vadd.f32 %v1568, %v1569
  %v1571 = vrot.slane %v1570, 1
  %v1572 = vadd.f32 %v1570, %v1571
  %v1573 = vadd.f32 %v1572, %v1505
  %v1574 = vmul.f32 %v1492, %v1508
  %v1575 = vsel %vm1511, %v1574, 0.0
  %1576 = vadd.xlane.f32.xlu0 %v1575
  %v1577 = vpop.xlane.xlu0 %1576
  %v1579 = vrot.slane %v1577, 2
  %v1581 = vsel %vm1030, %v1579, 0.0
  %v1582 = vrot.slane %v1581, 4
  %v1583 = vadd.f32 %v1581, %v1582
  %v1584 = vrot.slane %v1583, 2
  %v1585 = vadd.f32 %v1583, %v1584
  %v1586 = vrot.slane %v1585, 1
  %v1587 = vadd.f32 %v1585, %v1586
  %v1588 = vadd.f32 %v1587, %v1505
  %v1589 = vmul.f32 %v1492, %v1526
  %v1590 = vsel %vm1529, %v1589, 0.0
  %1591 = vadd.xlane.f32.xlu0 %v1590
  %v1592 = vpop.xlane.xlu0 %1591
  %v1594 = vrot.slane %v1592, 4
  %v1596 = vsel %vm1030, %v1594, 0.0
  %v1597 = vrot.slane %v1596, 4
  %v1598 = vadd.f32 %v1596, %v1597
  %v1599 = vrot.slane %v1598, 2
  %v1600 = vadd.f32 %v1598, %v1599
  %v1601 = vrot.slane %v1600, 1
  %v1602 = vadd.f32 %v1600, %v1601
  %v1603 = vadd.f32 %v1602, %v1505
  %v1604 = vmul.f32 %v1492, %v1544
  %v1605 = vsel %vm1547, %v1604, 0.0
  %1606 = vadd.xlane.f32.xlu0 %v1605
  %v1607 = vpop.xlane.xlu0 %1606
  %v1609 = vrot.slane %v1607, 6
  %v1611 = vsel %vm1030, %v1609, 0.0
  %v1612 = vrot.slane %v1611, 4
  %v1613 = vadd.f32 %v1611, %v1612
  %v1614 = vrot.slane %v1613, 2
  %v1615 = vadd.f32 %v1613, %v1614
  %v1616 = vrot.slane %v1615, 1
  %v1617 = vadd.f32 %v1615, %v1616
  %v1618 = vadd.f32 %v1617, %v1505
  %v1620 = vperm.slane %v1525, 0
  %v1623 = vperm.slane %v1543, 0
  %v1626 = vperm.slane %v1561, 0
  %v1629 = vperm.slane %v1573, 0
  %v1632 = vperm.slane %v1588, 0
  %v1635 = vperm.slane %v1603, 0
  %v1638 = vperm.slane %v1618, 0
  %vm1640 = vcmask 1040384
  %v1641 = vsel %vm1640, %v1506, %v1620
  %v1642 = vsel %vm1030, %v1641, %v1623
  %vm1643 = vcmask 1042432
  %v1644 = vsel %vm1643, %v1642, %v1626
  %v1645 = vsel %vm511, %v1644, %v1629
  %vm1646 = vcmask 1044480
  %v1647 = vsel %vm1646, %v1645, %v1632
  %v1648 = vsel %vm1033, %v1647, %v1635
  %vm1649 = vcmask 1046528
  %v1650 = vsel %vm1649, %v1648, %v1638
  %v1651 = vsub.f32 0.0, %v1650
  %v1652 = vmul.f32 %v1651, 1.442695
  %v1653 = vpow.pop %v1652
  %v1654 = vadd.f32 %v1653, 1.0
  %v1655 = vrcp.pop %v1654
  %v1656 = vmul.f32 %v1654, %v1655
  %v1657 = vsub.f32 1.0, %v1656
  %v1658 = vmul.f32 %v1655, %v1657
  %v1659 = vadd.f32 %v1655, %v1658
  %vm1660 = vweird.f32 %v1654
  %vm1661 = vweird.f32 %v1655
  %vm1662 = vmor %vm1660, %vm1661
  %v1663 = vsel %vm1662, %v1655, %v1659
  %v1664 = vand.u32 2147483647, %v1654
  %vm1665 = vcmp.eq.f32.partialorder %v1664, 8.507059e+37
  %v1666 = vand.u32 %v1654, 2147483648
  %v1667 = vor.u32 1.1754944e-38, %v1666
  %v1668 = vsel %vm1665, %v1667, %v1663
  %v1669 = vmul.f32 1.0, %v1668
  %vm1670 = vcmask 7168
  %1671 = vst.msk [vmem:[%s9] sm:$0xff] %vm1670, %v1669
  // Predicated region
  $region38: #{image_discriminator_forward.1} parent=0 // pred_check
    _
  $region39: #{image_discriminator_forward.1} parent=0 // pred_check_branch
    %1673 = sbr.rel (0) target = $region41
  $region40: #{image_discriminator_forward.1} parent=0 // pred_region
    _
  $region41: #{image_discriminator_forward.1} parent=0 // pred_fallthru
    _
  // Predicated region
  $region42: #{image_discriminator_forward.1} parent=0 // pred_check
    _
  $region43: #{image_discriminator_forward.1} parent=0 // pred_check_branch
    %1675 = sbr.rel (0) target = $region45
  $region44: #{image_discriminator_forward.1} parent=0 // pred_region
    _
  $region45: #{image_discriminator_forward.1} parent=0 // pred_fallthru
    _

</llo_original>
